<compile_context>
chip_gen: v5e
topology: v5e:2x2
jax: 0.10.0
libtpu: 0.0.40
codegen_flags: <defaults>
</compile_context>

<pallas_src>
import numpy as np
import jax
import jax.numpy as jnp
from jax import lax
from jax.experimental import pallas as pl
from jax.experimental.pallas import tpu as pltpu

LRELU_SLOPE = 0.2
BN_EPS = 1e-5


def _lrelu(x):
    return jnp.where(x > 0, x, LRELU_SLOPE * x)


def _whole(ndim):
    """Index map for a full-array block under grid=(1,)."""
    return lambda *_: (0,) * ndim


# --------------------------------------------------------------------------- #
# Host-built constants (one-time, numpy)
# --------------------------------------------------------------------------- #

def _dense_conv_matrix(w, s_in, stride, pad):
    """Per-sample dense matrix of Conv2d(c_in->c_out, k=4, stride, pad, no bias).

    Input rows:  channel-major NCHW flatten  c*s_in^2 + y*s_in + x
    Output cols: channel-major NCHW flatten  o*s_out^2 + oy*s_out + ox
    so `x_flat @ M` == the conv, and the output flatten is already NCHW.
    """
    c_out, c_in, kh, kw = w.shape
    s_out = (s_in + 2 * pad - kh) // stride + 1
    m = np.zeros((c_in * s_in * s_in, c_out * s_out * s_out), np.float32)
    for o in range(c_out):
        for oy in range(s_out):
            for ox in range(s_out):
                col = o * s_out * s_out + oy * s_out + ox
                for c in range(c_in):
                    for ky in range(kh):
                        y = stride * oy - pad + ky
                        if not (0 <= y < s_in):
                            continue
                        for kx in range(kw):
                            xx = stride * ox - pad + kx
                            if not (0 <= xx < s_in):
                                continue
                            m[c * s_in * s_in + y * s_in + xx, col] = w[o, c, ky, kx]
    return m


def _plan_levels(isize, ngf):
    levels = []
    s, c = isize // 2, ngf
    while s > 4:
        levels.append((s, c, 2 * c))   # (input spatial, c_in, c_out)
        s, c = s // 2, 2 * c
    return levels, c, s                # c_last, s_last (=4)


# --------------------------------------------------------------------------- #
# Fused Pallas kernel
# --------------------------------------------------------------------------- #

def _make_kernel(batch, levels):
    """Fused NetD forward. Per level refs: (dense conv matrix, rred, f32 slab)."""
    num_lvl = len(levels)
    inv_n = 1.0 / float(batch)

    def kernel(*refs):
        x_ref, w1_ref = refs[0], refs[1]
        lvl_refs = [refs[2 + 3 * l: 5 + 3 * l] for l in range(num_lvl)]
        feat_ref, cls_ref = refs[2 + 3 * num_lvl], refs[3 + 3 * num_lvl]

        # -- initial: Conv(nc->ngf, 4, s2, p1) + LeakyReLU as one bf16 GEMM -----
        act = jnp.dot(x_ref[...].astype(jnp.bfloat16), w1_ref[...],
                      preferred_element_type=jnp.float32)        # (N, ngf*s0^2)
        act = _lrelu(act)

        # -- pyramid: Conv(4, s2, p1) + BatchNorm2d + LeakyReLU, one GEMM each --
        for l, (s_in, c_in, c_out) in enumerate(levels):
            wd_ref, rred_ref, fs_ref = lvl_refs[l]
            a = jnp.dot(act.astype(jnp.bfloat16), wd_ref[...],
                        preferred_element_type=jnp.float32)      # (N, c_out*s_out^2)

            # BatchNorm2d, training-mode whole-batch stats (exact: whole batch
            # is resident in this single block).  Columns are channel-major, so
            # per-channel reduce/broadcast is two tiny constant matmuls.
            colmean = jnp.sum(a, axis=0, keepdims=True) * inv_n          # (1, D)
            colmsq = jnp.sum(a * a, axis=0, keepdims=True) * inv_n       # (1, D)
            rexp = fs_ref[0:c_out, :]                                    # (c_out, D)
            mean_b = jnp.dot(
                jnp.dot(colmean, rred_ref[...], preferred_element_type=jnp.float32),
                rexp, preferred_element_type=jnp.float32)                # (1, D)
            msq_b = jnp.dot(
                jnp.dot(colmsq, rred_ref[...], preferred_element_type=jnp.float32),
                rexp, preferred_element_type=jnp.float32)                # (1, D)
            var_b = msq_b - mean_b * mean_b                              # biased var
            gamma = fs_ref[c_out:c_out + 1, :]
            beta = fs_ref[c_out + 1:c_out + 2, :]
            y = (a - mean_b) * lax.rsqrt(var_b + BN_EPS) * gamma + beta
            act = _lrelu(y)                                              # (N, D) f32

        # Lane-dense features store; row-major layout is already NCHW flatten.
        feat_ref[...] = act

        # -- classifier: Conv(c_last->1, 4, s1, p0) + Sigmoid --------------------
        # A 4x4 kernel on a 4x4 map is a full weighted reduction per sample:
        # VPU multiply + lane-sum, no MXU pass, no selector matmul.
        c_last = levels[-1][2]
        w3row = lvl_refs[-1][2][c_last + 2:c_last + 3, :]                # (1, D)
        logits = jnp.sum(act * w3row, axis=1, keepdims=True)             # (N, 1)
        cls_ref[...] = jax.nn.sigmoid(logits)

    return kernel


# --------------------------------------------------------------------------- #
# Parameters, one-time packing, and per-call wrapper
# --------------------------------------------------------------------------- #

def init_netd_params(key, isize, nc, ngf):
    """DCGAN-style init: conv weights ~ N(0, 0.02), no biases; fresh BatchNorm2d
    (gamma=1, beta=0; forward uses training-mode batch statistics)."""
    assert isize % 16 == 0, "isize has to be a multiple of 16"
    params = {"pyramid": [], "bn": []}
    k0, key = jax.random.split(key)
    params["initial"] = 0.02 * jax.random.normal(k0, (ngf, nc, 4, 4), jnp.float32)
    csize, cndf = isize // 2, ngf
    while csize > 4:
        kk, key = jax.random.split(key)
        params["pyramid"].append(
            0.02 * jax.random.normal(kk, (2 * cndf, cndf, 4, 4), jnp.float32))
        params["bn"].append(
            jnp.stack([jnp.ones((2 * cndf,), jnp.float32),
                       jnp.zeros((2 * cndf,), jnp.float32)]))
        cndf, csize = 2 * cndf, csize // 2
    kf, _ = jax.random.split(key)
    params["final"] = 0.02 * jax.random.normal(kf, (1, cndf, 4, 4), jnp.float32)
    return params


def make_netd(isize, nc, ngf, batch):
    """Returns (prepare, forward): prepare() packs weights once (host side);
    forward(packed, x) is the jit-able per-call path."""
    assert isize % 16 == 0 and isize >= 16, "isize has to be a multiple of 16"
    levels, c_last, s_last = _plan_levels(isize, ngf)
    d_last = c_last * s_last * s_last
    m_in = nc * isize * isize
    num_lvl = len(levels)
    kernel = _make_kernel(batch, levels)

    def prepare(params):
        """One-time, x-independent weight packing (numpy, off the hot path)."""
        w1d = _dense_conv_matrix(np.asarray(params["initial"], np.float32),
                                 isize, 2, 1)                     # (nc*is^2, ngf*s0^2)
        packed = {"w1d": jnp.asarray(w1d, jnp.bfloat16), "lvls": []}
        for idx, ((s_in, c_in, c_out), w, bn) in enumerate(
                zip(levels, params["pyramid"], params["bn"])):
            s_out = s_in // 2
            sq = s_out * s_out
            wd = _dense_conv_matrix(np.asarray(w, np.float32), s_in, 2, 1)
            # per-channel mean over the sq positions of each channel group ...
            rred = np.kron(np.eye(c_out, dtype=np.float32),
                           np.ones((sq, 1), np.float32)) / float(sq)   # (D, c_out)
            # ... and broadcast back to the D channel-major columns
            rexp = np.kron(np.eye(c_out, dtype=np.float32),
                           np.ones((1, sq), np.float32))                # (c_out, D)
            gamma = np.repeat(np.asarray(bn[0], np.float32), sq)[None, :]
            beta = np.repeat(np.asarray(bn[1], np.float32), sq)[None, :]
            rows = [rexp, gamma, beta]
            if idx == num_lvl - 1:
                # classifier conv weight, flattened to the features' column order
                w3row = np.asarray(params["final"], np.float32).reshape(1, c_out * sq)
                rows.append(w3row)
            fslab = np.concatenate(rows, axis=0)                         # f32 slab
            packed["lvls"].append((jnp.asarray(wd, jnp.bfloat16),
                                   jnp.asarray(rred, jnp.float32),
                                   jnp.asarray(fslab, jnp.float32)))
        return packed

    def forward(packed, x):
        # NCHW flatten per sample is contiguous -> free reshape, no transpose.
        x2 = x.reshape(batch, m_in)
        inputs = [x2, packed["w1d"]]
        for wd, rred, fslab in packed["lvls"]:
            inputs += [wd, rred, fslab]

        feat, cls = pl.pallas_call(
            kernel,
            out_shape=(jax.ShapeDtypeStruct((batch, d_last), jnp.float32),
                       jax.ShapeDtypeStruct((batch, 1), jnp.float32)),
            grid=(1,),
            in_specs=[pl.BlockSpec(a.shape, _whole(a.ndim)) for a in inputs],
            out_specs=(pl.BlockSpec((batch, d_last), _whole(2)),
                       pl.BlockSpec((batch, 1), _whole(2))),
            compiler_params=pltpu.CompilerParams(
                dimension_semantics=("arbitrary",)),
        )(*inputs)

        # Features slab is already NCHW row-major: reshape only (free).
        features = feat.reshape(batch, c_last, s_last, s_last)
        return cls.reshape(-1), features

    return prepare, forward


# --------------------------------------------------------------------------- #
# Pure-JAX f32 reference (for validation)
# --------------------------------------------------------------------------- #

def netd_reference(params, x):
    def conv(v, w, stride, pad):
        return lax.conv_general_dilated(
            v, w, window_strides=(stride, stride),
            padding=((pad, pad), (pad, pad)),
            dimension_numbers=("NCHW", "OIHW", "NCHW"))

    y = _lrelu(conv(x, params["initial"], 2, 1))
    for w, bn in zip(params["pyramid"], params["bn"]):
        y = conv(y, w, 2, 1)
        mean = jnp.mean(y, axis=(0, 2, 3), keepdims=True)
        var = jnp.mean((y - mean) ** 2, axis=(0, 2, 3), keepdims=True)
        y = (y - mean) * lax.rsqrt(var + BN_EPS)
        y = y * bn[0].reshape(1, -1, 1, 1) + bn[1].reshape(1, -1, 1, 1)
        y = _lrelu(y)
    features = y
    logits = conv(features, params["final"], 1, 0)        # (N, 1, 1, 1)
    return jax.nn.sigmoid(logits).reshape(-1), features


# --------------------------------------------------------------------------- #
# main
# --------------------------------------------------------------------------- #

if __name__ == "__main__":
    isize, nc, ngf, batch = 16, 3, 8, 2
    key = jax.random.PRNGKey(0)
    kp, kx = jax.random.split(key)

    params = init_netd_params(kp, isize, nc, ngf)
    x = jax.random.normal(kx, (batch, nc, isize, isize), jnp.float32)

    prepare, forward = make_netd(isize, nc, ngf, batch)
    packed = prepare(params)                      # one-time host-side packing
    fwd = jax.jit(forward)
    classifier, features = fwd(packed, x)
    jax.block_until_ready((classifier, features))

    assert classifier.shape == (batch,)
    assert features.shape == (batch, 2 * ngf, 4, 4)
    assert bool(jnp.all((classifier >= 0.0) & (classifier <= 1.0)))
    assert bool(jnp.all(jnp.isfinite(features)))

    # Validate against the plain-JAX f32 reference (bf16 MXU operands in the
    # fused kernel -> loose tolerance).
    cls_ref, feat_ref = netd_reference(params, x)
    np.testing.assert_allclose(np.asarray(classifier), np.asarray(cls_ref),
                               rtol=1e-1, atol=1e-1)
    np.testing.assert_allclose(np.asarray(features), np.asarray(feat_ref),
                               rtol=1e-1, atol=1e-1)
    print("KERNEL_OK")
</pallas_src>

<mosaic_0001>
module attributes {stable_mosaic.version = 11 : i64} {
  func.func @kernel(%arg0: i32, %arg1: memref<2x768xf32, #tpu.memory_space<vmem>>, %arg2: memref<768x512xbf16, #tpu.memory_space<vmem>>, %arg3: memref<512x256xbf16, #tpu.memory_space<vmem>>, %arg4: memref<256x16xf32, #tpu.memory_space<vmem>>, %arg5: memref<19x256xf32, #tpu.memory_space<vmem>>, %arg6: memref<2x256xf32, #tpu.memory_space<vmem>>, %arg7: memref<2x1xf32, #tpu.memory_space<vmem>>) attributes {dimension_semantics = [#tpu.dimension_semantics<arbitrary>], iteration_bounds = array<i64: 1>, scalar_prefetch = 0 : i64, scratch_operands = 0 : i64, tpu.core_type = #tpu.core_type<tc>, window_params = [{pipeline_mode = #tpu.pipeline_mode<synchronous>, transform_indices = @transform_0, window_bounds = array<i64: 2, 768>}, {pipeline_mode = #tpu.pipeline_mode<synchronous>, transform_indices = @transform_1, window_bounds = array<i64: 768, 512>}, {pipeline_mode = #tpu.pipeline_mode<synchronous>, transform_indices = @transform_2, window_bounds = array<i64: 512, 256>}, {pipeline_mode = #tpu.pipeline_mode<synchronous>, transform_indices = @transform_3, window_bounds = array<i64: 256, 16>}, {pipeline_mode = #tpu.pipeline_mode<synchronous>, transform_indices = @transform_4, window_bounds = array<i64: 19, 256>}, {pipeline_mode = #tpu.pipeline_mode<synchronous>, transform_indices = @transform_5, window_bounds = array<i64: 2, 256>}, {pipeline_mode = #tpu.pipeline_mode<synchronous>, transform_indices = @transform_6, window_bounds = array<i64: 2, 1>}]} {
    %c0 = arith.constant 0 : index
    %c0_0 = arith.constant 0 : index
    %0 = vector.load %arg1[%c0, %c0_0] : memref<2x768xf32, #tpu.memory_space<vmem>>, vector<2x768xf32>
    %1 = arith.truncf %0 : vector<2x768xf32> to vector<2x768xbf16>
    %c0_1 = arith.constant 0 : index
    %c0_2 = arith.constant 0 : index
    %2 = vector.load %arg2[%c0_1, %c0_2] : memref<768x512xbf16, #tpu.memory_space<vmem>>, vector<768x512xbf16>
    %cst = arith.constant dense<0.000000e+00> : vector<2x512xf32>
    %3 = tpu.matmul %1, %2, %cst {dimension_numbers = #tpu.dot_dimension_numbers<[1], [0], [0], [1], [0, 0, 1, 1], [], []>} : vector<2x768xbf16>, vector<768x512xbf16>, vector<2x512xf32> -> vector<2x512xf32>
    %cst_3 = arith.constant 0.000000e+00 : f32
    %4 = vector.broadcast %cst_3 : f32 to vector<2x512xf32>
    %5 = arith.cmpf ogt, %3, %4 : vector<2x512xf32>
    %cst_4 = arith.constant 2.000000e-01 : f32
    %6 = vector.broadcast %cst_4 : f32 to vector<2x512xf32>
    %7 = arith.mulf %6, %3 : vector<2x512xf32>
    %8 = arith.select %5, %3, %7 : vector<2x512xi1>, vector<2x512xf32>
    %9 = arith.truncf %8 : vector<2x512xf32> to vector<2x512xbf16>
    %c0_5 = arith.constant 0 : index
    %c0_6 = arith.constant 0 : index
    %10 = vector.load %arg3[%c0_5, %c0_6] : memref<512x256xbf16, #tpu.memory_space<vmem>>, vector<512x256xbf16>
    %cst_7 = arith.constant dense<0.000000e+00> : vector<2x256xf32>
    %11 = tpu.matmul %9, %10, %cst_7 {dimension_numbers = #tpu.dot_dimension_numbers<[1], [0], [0], [1], [0, 0, 1, 1], [], []>} : vector<2x512xbf16>, vector<512x256xbf16>, vector<2x256xf32> -> vector<2x256xf32>
    %cst_8 = arith.constant dense<0.000000e+00> : vector<256xf32>
    %12 = vector.multi_reduction <add>, %11, %cst_8 [0] : vector<2x256xf32> to vector<256xf32>
    %13 = vector.shape_cast %12 : vector<256xf32> to vector<1x256xf32>
    %cst_9 = arith.constant 5.000000e-01 : f32
    %14 = vector.broadcast %cst_9 : f32 to vector<1x256xf32>
    %15 = arith.mulf %13, %14 : vector<1x256xf32>
    %16 = arith.mulf %11, %11 : vector<2x256xf32>
    %cst_10 = arith.constant dense<0.000000e+00> : vector<256xf32>
    %17 = vector.multi_reduction <add>, %16, %cst_10 [0] : vector<2x256xf32> to vector<256xf32>
    %18 = vector.shape_cast %17 : vector<256xf32> to vector<1x256xf32>
    %cst_11 = arith.constant 5.000000e-01 : f32
    %19 = vector.broadcast %cst_11 : f32 to vector<1x256xf32>
    %20 = arith.mulf %18, %19 : vector<1x256xf32>
    %c0_12 = arith.constant 0 : index
    %c0_13 = arith.constant 0 : index
    %21 = vector.load %arg5[%c0_12, %c0_13] : memref<19x256xf32, #tpu.memory_space<vmem>>, vector<16x256xf32>
    %c0_14 = arith.constant 0 : index
    %c0_15 = arith.constant 0 : index
    %22 = vector.load %arg4[%c0_14, %c0_15] : memref<256x16xf32, #tpu.memory_space<vmem>>, vector<256x16xf32>
    %cst_16 = arith.constant dense<0.000000e+00> : vector<1x16xf32>
    %23 = tpu.matmul %15, %22, %cst_16 {dimension_numbers = #tpu.dot_dimension_numbers<[1], [0], [0], [1], [0, 0, 1, 1], [], []>} : vector<1x256xf32>, vector<256x16xf32>, vector<1x16xf32> -> vector<1x16xf32>
    %cst_17 = arith.constant dense<0.000000e+00> : vector<1x256xf32>
    %24 = tpu.matmul %23, %21, %cst_17 {dimension_numbers = #tpu.dot_dimension_numbers<[1], [0], [0], [1], [0, 0, 1, 1], [], []>} : vector<1x16xf32>, vector<16x256xf32>, vector<1x256xf32> -> vector<1x256xf32>
    %c0_18 = arith.constant 0 : index
    %c0_19 = arith.constant 0 : index
    %25 = vector.load %arg4[%c0_18, %c0_19] : memref<256x16xf32, #tpu.memory_space<vmem>>, vector<256x16xf32>
    %cst_20 = arith.constant dense<0.000000e+00> : vector<1x16xf32>
    %26 = tpu.matmul %20, %25, %cst_20 {dimension_numbers = #tpu.dot_dimension_numbers<[1], [0], [0], [1], [0, 0, 1, 1], [], []>} : vector<1x256xf32>, vector<256x16xf32>, vector<1x16xf32> -> vector<1x16xf32>
    %cst_21 = arith.constant dense<0.000000e+00> : vector<1x256xf32>
    %27 = tpu.matmul %26, %21, %cst_21 {dimension_numbers = #tpu.dot_dimension_numbers<[1], [0], [0], [1], [0, 0, 1, 1], [], []>} : vector<1x16xf32>, vector<16x256xf32>, vector<1x256xf32> -> vector<1x256xf32>
    %28 = arith.mulf %24, %24 : vector<1x256xf32>
    %29 = arith.subf %27, %28 : vector<1x256xf32>
    %c16 = arith.constant 16 : index
    %c0_22 = arith.constant 0 : index
    %30 = vector.load %arg5[%c16, %c0_22] : memref<19x256xf32, #tpu.memory_space<vmem>>, vector<1x256xf32>
    %c17 = arith.constant 17 : index
    %c0_23 = arith.constant 0 : index
    %31 = vector.load %arg5[%c17, %c0_23] : memref<19x256xf32, #tpu.memory_space<vmem>>, vector<1x256xf32>
    %32 = vector.broadcast %24 : vector<1x256xf32> to vector<2x256xf32>
    %33 = arith.subf %11, %32 : vector<2x256xf32>
    %cst_24 = arith.constant 9.99999974E-6 : f32
    %34 = vector.broadcast %cst_24 : f32 to vector<1x256xf32>
    %35 = arith.addf %29, %34 : vector<1x256xf32>
    %36 = math.rsqrt %35 : vector<1x256xf32>
    %37 = vector.broadcast %36 : vector<1x256xf32> to vector<2x256xf32>
    %38 = arith.mulf %33, %37 : vector<2x256xf32>
    %39 = vector.broadcast %30 : vector<1x256xf32> to vector<2x256xf32>
    %40 = arith.mulf %38, %39 : vector<2x256xf32>
    %41 = vector.broadcast %31 : vector<1x256xf32> to vector<2x256xf32>
    %42 = arith.addf %40, %41 : vector<2x256xf32>
    %cst_25 = arith.constant 0.000000e+00 : f32
    %43 = vector.broadcast %cst_25 : f32 to vector<2x256xf32>
    %44 = arith.cmpf ogt, %42, %43 : vector<2x256xf32>
    %cst_26 = arith.constant 2.000000e-01 : f32
    %45 = vector.broadcast %cst_26 : f32 to vector<2x256xf32>
    %46 = arith.mulf %45, %42 : vector<2x256xf32>
    %47 = arith.select %44, %42, %46 : vector<2x256xi1>, vector<2x256xf32>
    %c0_27 = arith.constant 0 : index
    %c0_28 = arith.constant 0 : index
    %48 = vector.load %arg6[%c0_27, %c0_28] : memref<2x256xf32, #tpu.memory_space<vmem>>, vector<2x256xf32>
    tpu.vector_store %arg6[%c0_27, %c0_28], %47 {strides = array<i32>} : memref<2x256xf32, #tpu.memory_space<vmem>>, vector<2x256xf32>,
    %c18 = arith.constant 18 : index
    %c0_29 = arith.constant 0 : index
    %49 = vector.load %arg5[%c18, %c0_29] : memref<19x256xf32, #tpu.memory_space<vmem>>, vector<1x256xf32>
    %50 = vector.broadcast %49 : vector<1x256xf32> to vector<2x256xf32>
    %51 = arith.mulf %47, %50 : vector<2x256xf32>
    %cst_30 = arith.constant dense<0.000000e+00> : vector<2xf32>
    %52 = vector.multi_reduction <add>, %51, %cst_30 [1] : vector<2x256xf32> to vector<2xf32>
    %53 = vector.shape_cast %52 : vector<2xf32> to vector<2x1xf32>
    %54 = arith.negf %53 : vector<2x1xf32>
    %55 = math.exp %54 : vector<2x1xf32>
    %cst_31 = arith.constant 1.000000e+00 : f32
    %56 = vector.broadcast %cst_31 : f32 to vector<2x1xf32>
    %57 = arith.addf %56, %55 : vector<2x1xf32>
    %58 = arith.divf %56, %57 : vector<2x1xf32>
    %c0_32 = arith.constant 0 : index
    %c0_33 = arith.constant 0 : index
    %59 = vector.load %arg7[%c0_32, %c0_33] : memref<2x1xf32, #tpu.memory_space<vmem>>, vector<2x1xf32>
    tpu.vector_store %arg7[%c0_32, %c0_33], %58 {strides = array<i32>} : memref<2x1xf32, #tpu.memory_space<vmem>>, vector<2x1xf32>,
    return
  }
  func.func @transform_0(%arg0: i32) -> (i32, i32) {
    %c0_i32 = arith.constant 0 : i32
    %c0_i32_0 = arith.constant 0 : i32
    %c0_i32_1 = arith.constant 0 : i32
    return %c0_i32, %c0_i32_0 : i32, i32
  }
  func.func @transform_1(%arg0: i32) -> (i32, i32) {
    %c0_i32 = arith.constant 0 : i32
    %c0_i32_0 = arith.constant 0 : i32
    %c0_i32_1 = arith.constant 0 : i32
    return %c0_i32, %c0_i32_0 : i32, i32
  }
  func.func @transform_2(%arg0: i32) -> (i32, i32) {
    %c0_i32 = arith.constant 0 : i32
    %c0_i32_0 = arith.constant 0 : i32
    %c0_i32_1 = arith.constant 0 : i32
    return %c0_i32, %c0_i32_0 : i32, i32
  }
  func.func @transform_3(%arg0: i32) -> (i32, i32) {
    %c0_i32 = arith.constant 0 : i32
    %c0_i32_0 = arith.constant 0 : i32
    %c0_i32_1 = arith.constant 0 : i32
    return %c0_i32, %c0_i32_0 : i32, i32
  }
  func.func @transform_4(%arg0: i32) -> (i32, i32) {
    %c0_i32 = arith.constant 0 : i32
    %c0_i32_0 = arith.constant 0 : i32
    %c0_i32_1 = arith.constant 0 : i32
    return %c0_i32, %c0_i32_0 : i32, i32
  }
  func.func @transform_5(%arg0: i32) -> (i32, i32) {
    %c0_i32 = arith.constant 0 : i32
    %c0_i32_0 = arith.constant 0 : i32
    %c0_i32_1 = arith.constant 0 : i32
    return %c0_i32, %c0_i32_0 : i32, i32
  }
  func.func @transform_6(%arg0: i32) -> (i32, i32) {
    %c0_i32 = arith.constant 0 : i32
    %c0_i32_0 = arith.constant 0 : i32
    %c0_i32_1 = arith.constant 0 : i32
    return %c0_i32, %c0_i32_0 : i32, i32
  }
}

</mosaic_0001>

<llo_original>
// kernel: forward.1
$region0: #{forward.1}
  #allocation0 [shape = 'u32[]', space=smem, size = 0x4, offset = 0x4, fixed_abs, tag = 'smem constant byte address 0x4 - core index']
  #allocation1 [shape = 'u32[72,128]{1,0:T(1,128)}', space=vmem, size = 0x9000, scoped, tag = 'internal scratch']
  %s0 = inlined_call_operand.vmem [shape: f32[2,768], index: 0, kind: input, shape index: {}]
  %s1 = inlined_call_operand.hbm [shape: bf16[768,512], index: 1, kind: input, shape index: {}]
  %s2 = inlined_call_operand.hbm [shape: bf16[512,256], index: 2, kind: input, shape index: {}]
  %s3 = inlined_call_operand.vmem [shape: f32[256,16], index: 3, kind: input, shape index: {}]
  %s4 = inlined_call_operand.vmem [shape: f32[19,256], index: 4, kind: input, shape index: {}]
  %s5 = inlined_call_operand.vmem [shape: f32[2,256], index: 5, kind: output, shape index: {0}]
  %s6 = inlined_call_operand.vmem [shape: f32[2,1], index: 6, kind: output, shape index: {1}]
  %7 = xla_tuple %s5, %s6
  %s8 = sld [smem:[#allocation0]]
  $region46: #{forward.1} parent=0
    _
  %s10 = ssub.s32 1, %s8
  %s11 = scalar_select 0, %s10, %s8
  $region1: #{forward.1} parent=0
    #allocation2 [shape = 'u8[786432]{0}', space=vmem, size = 0xc0000, scoped, tag = 'input window, operand 1, single buffered']
    #allocation3 [shape = 's32[1]{0}', space=sflag, size = 0x4, scoped, tag = 'scoped memory for forward.1']
    #allocation4 [shape = 'u8[262144]{0}', space=vmem, size = 0x40000, scoped, tag = 'input window, operand 2, single buffered']
    #allocation5 [shape = 's32[1]{0}', space=sflag, size = 0x4, scoped, tag = 'scoped memory for forward.1']
    %12 = vsyncpa [#allocation3], 0
    %13 = vsyncpa [#allocation5], 0
    // Predicated region
    $region2: #{forward.1} parent=1 // pred_check
      _
    $region3: #{forward.1} parent=1 // pred_check_branch
      %15 = sbr.rel (0) target = $region5
    $region4: #{forward.1} parent=1 // pred_region
      _
    $region5: #{forward.1} parent=1 // pred_fallthru
      _
    // Predicated region
    $region6: #{forward.1} parent=1 // pred_check
      _
    $region7: #{forward.1} parent=1 // pred_check_branch
      %17 = sbr.rel (0) target = $region9
    $region8: #{forward.1} parent=1 // pred_region
      %19 = vsyncadd [#allocation3], 0
      %s20 = sshll.u32 %s1, 4
      %s21 = int_to_ptr.hbm [resolvable:$true] %s20
      %s22 = sshll.u32 [#allocation2], 4
      %s23 = int_to_ptr.vmem [resolvable:$true] %s22
      %28 = dma.hbm_to_vmem [thread:$0]  %s21, 24576, %s23, [#allocation3], 256, 256, 16
    $region9: #{forward.1} parent=1 // pred_fallthru
      _
    // Predicated region
    $region10: #{forward.1} parent=1 // pred_check
      _
    $region11: #{forward.1} parent=1 // pred_check_branch
      %30 = sbr.rel (0) target = $region13
    $region12: #{forward.1} parent=1 // pred_region
      %32 = vsyncadd [#allocation5], 0
      %s33 = sshll.u32 %s2, 4
      %s34 = int_to_ptr.hbm [resolvable:$true] %s33
      %s35 = sshll.u32 [#allocation4], 4
      %s36 = int_to_ptr.vmem [resolvable:$true] %s35
      %41 = dma.hbm_to_vmem [thread:$0]  %s34, 8192, %s36, [#allocation5], 128, 128, 8
    $region13: #{forward.1} parent=1 // pred_fallthru
      _
    // Predicated region
    $region14: #{forward.1} parent=1 // pred_check
      _
    $region15: #{forward.1} parent=1 // pred_check_branch
      %43 = sbr.rel (0) target = $region17
    $region16: #{forward.1} parent=1 // pred_region
      _
    $region17: #{forward.1} parent=1 // pred_fallthru
      _
    // Predicated region
    $region18: #{forward.1} parent=1 // pred_check
      _
    $region19: #{forward.1} parent=1 // pred_check_branch
      %45 = sbr.rel (0) target = $region21
    $region20: #{forward.1} parent=1 // pred_region
      _
    $region21: #{forward.1} parent=1 // pred_fallthru
      _
    // Predicated region
    $region22: #{forward.1} parent=1 // pred_check
      _
    $region23: #{forward.1} parent=1 // pred_check_branch
      %47 = sbr.rel (0) target = $region25
    $region24: #{forward.1} parent=1 // pred_region
      %49 = dma.done [#allocation3], 24576
    $region25: #{forward.1} parent=1 // pred_fallthru
      _
    // Predicated region
    $region26: #{forward.1} parent=1 // pred_check
      _
    $region27: #{forward.1} parent=1 // pred_check_branch
      %51 = sbr.rel (0) target = $region29
    $region28: #{forward.1} parent=1 // pred_region
      %53 = dma.done [#allocation5], 8192
    $region29: #{forward.1} parent=1 // pred_fallthru
      _
    %v54 = vld [vmem:[%s0] sm:$0xff]
    %v55 = vld [vmem:[%s0 + $0x8] sm:$0xf]
    %58 = vst [vmem:[#allocation1] ss:$4 sm:$0xff] %v54
    %s59 = scalar_lea.vmem [#allocation1], 32
    %60 = vst [vmem:[%s59] ss:$4 sm:$0xff] %v55
    %v61 = vld.sshfl [vmem:[#allocation1] sm:$0xff pattern:$0x73625140]
    %v62 = vld.sshfl [vmem:[#allocation1 + $0x8] sm:$0xff pattern:$0x73625140]
    %v63 = vld.sshfl [vmem:[#allocation1 + $0x10] sm:$0xff pattern:$0x73625140]
    %v64 = vld.sshfl [vmem:[#allocation1 + $0x18] sm:$0xff pattern:$0x73625140]
    %v65 = vld.sshfl [vmem:[#allocation1 + $0x20] sm:$0xff pattern:$0x73625140]
    %v66 = vld.sshfl [vmem:[#allocation1 + $0x28] sm:$0xff pattern:$0x73625140]
    %v73 = vpack.c.bf16 %v61, %v61
    %v74 = vpack.c.bf16 %v62, %v62
    %v75 = vpack.c.bf16 %v63, %v63
    %v76 = vpack.c.bf16 %v64, %v64
    %v77 = vpack.c.bf16 %v65, %v65
    %v78 = vpack.c.bf16 %v66, %v66
    %v79 = vld [vmem:[#allocation2] sm:$0xff]
    %v80 = vld [vmem:[#allocation2 + $0x8] sm:$0xff]
    %v81 = vld [vmem:[#allocation2 + $0x10] sm:$0xff]
    %v82 = vld [vmem:[#allocation2 + $0x18] sm:$0xff]
    %v83 = vld [vmem:[#allocation2 + $0x20] sm:$0xff]
    %v84 = vld [vmem:[#allocation2 + $0x28] sm:$0xff]
    %v85 = vld [vmem:[#allocation2 + $0x30] sm:$0xff]
    %v86 = vld [vmem:[#allocation2 + $0x38] sm:$0xff]
    %v87 = vld [vmem:[#allocation2 + $0x40] sm:$0xff]
    %v88 = vld [vmem:[#allocation2 + $0x48] sm:$0xff]
    %v89 = vld [vmem:[#allocation2 + $0x50] sm:$0xff]
    %v90 = vld [vmem:[#allocation2 + $0x58] sm:$0xff]
    %v91 = vld [vmem:[#allocation2 + $0x60] sm:$0xff]
    %v92 = vld [vmem:[#allocation2 + $0x68] sm:$0xff]
    %v93 = vld [vmem:[#allocation2 + $0x70] sm:$0xff]
    %v94 = vld [vmem:[#allocation2 + $0x78] sm:$0xff]
    %v95 = vld [vmem:[#allocation2 + $0x80] sm:$0xff]
    %v96 = vld [vmem:[#allocation2 + $0x88] sm:$0xff]
    %v97 = vld [vmem:[#allocation2 + $0x90] sm:$0xff]
    %v98 = vld [vmem:[#allocation2 + $0x98] sm:$0xff]
    %v99 = vld [vmem:[#allocation2 + $0xa0] sm:$0xff]
    %v100 = vld [vmem:[#allocation2 + $0xa8] sm:$0xff]
    %v101 = vld [vmem:[#allocation2 + $0xb0] sm:$0xff]
    %v102 = vld [vmem:[#allocation2 + $0xb8] sm:$0xff]
    %v103 = vld [vmem:[#allocation2 + $0xc0] sm:$0xff]
    %v104 = vld [vmem:[#allocation2 + $0xc8] sm:$0xff]
    %v105 = vld [vmem:[#allocation2 + $0xd0] sm:$0xff]
    %v106 = vld [vmem:[#allocation2 + $0xd8] sm:$0xff]
    %v107 = vld [vmem:[#allocation2 + $0xe0] sm:$0xff]
    %v108 = vld [vmem:[#allocation2 + $0xe8] sm:$0xff]
    %v109 = vld [vmem:[#allocation2 + $0xf0] sm:$0xff]
    %v110 = vld [vmem:[#allocation2 + $0xf8] sm:$0xff]
    %v111 = vld [vmem:[#allocation2 + $0x100] sm:$0xff]
    %v112 = vld [vmem:[#allocation2 + $0x108] sm:$0xff]
    %v113 = vld [vmem:[#allocation2 + $0x110] sm:$0xff]
    %v114 = vld [vmem:[#allocation2 + $0x118] sm:$0xff]
    %v115 = vld [vmem:[#allocation2 + $0x120] sm:$0xff]
    %v116 = vld [vmem:[#allocation2 + $0x128] sm:$0xff]
    %v117 = vld [vmem:[#allocation2 + $0x130] sm:$0xff]
    %v118 = vld [vmem:[#allocation2 + $0x138] sm:$0xff]
    %v119 = vld [vmem:[#allocation2 + $0x140] sm:$0xff]
    %v120 = vld [vmem:[#allocation2 + $0x148] sm:$0xff]
    %v121 = vld [vmem:[#allocation2 + $0x150] sm:$0xff]
    %v122 = vld [vmem:[#allocation2 + $0x158] sm:$0xff]
    %v123 = vld [vmem:[#allocation2 + $0x160] sm:$0xff]
    %v124 = vld [vmem:[#allocation2 + $0x168] sm:$0xff]
    %v125 = vld [vmem:[#allocation2 + $0x170] sm:$0xff]
    %v126 = vld [vmem:[#allocation2 + $0x178] sm:$0xff]
    %v127 = vld [vmem:[#allocation2 + $0x180] sm:$0xff]
    %v128 = vld [vmem:[#allocation2 + $0x188] sm:$0xff]
    %v129 = vld [vmem:[#allocation2 + $0x190] sm:$0xff]
    %v130 = vld [vmem:[#allocation2 + $0x198] sm:$0xff]
    %v131 = vld [vmem:[#allocation2 + $0x1a0] sm:$0xff]
    %v132 = vld [vmem:[#allocation2 + $0x1a8] sm:$0xff]
    %v133 = vld [vmem:[#allocation2 + $0x1b0] sm:$0xff]
    %v134 = vld [vmem:[#allocation2 + $0x1b8] sm:$0xff]
    %v135 = vld [vmem:[#allocation2 + $0x1c0] sm:$0xff]
    %v136 = vld [vmem:[#allocation2 + $0x1c8] sm:$0xff]
    %v137 = vld [vmem:[#allocation2 + $0x1d0] sm:$0xff]
    %v138 = vld [vmem:[#allocation2 + $0x1d8] sm:$0xff]
    %v139 = vld [vmem:[#allocation2 + $0x1e0] sm:$0xff]
    %v140 = vld [vmem:[#allocation2 + $0x1e8] sm:$0xff]
    %v141 = vld [vmem:[#allocation2 + $0x1f0] sm:$0xff]
    %v142 = vld [vmem:[#allocation2 + $0x1f8] sm:$0xff]
    %v143 = vld [vmem:[#allocation2 + $0x200] sm:$0xff]
    %v144 = vld [vmem:[#allocation2 + $0x208] sm:$0xff]
    %v145 = vld [vmem:[#allocation2 + $0x210] sm:$0xff]
    %v146 = vld [vmem:[#allocation2 + $0x218] sm:$0xff]
    %v147 = vld [vmem:[#allocation2 + $0x220] sm:$0xff]
    %v148 = vld [vmem:[#allocation2 + $0x228] sm:$0xff]
    %v149 = vld [vmem:[#allocation2 + $0x230] sm:$0xff]
    %v150 = vld [vmem:[#allocation2 + $0x238] sm:$0xff]
    %v151 = vld [vmem:[#allocation2 + $0x240] sm:$0xff]
    %v152 = vld [vmem:[#allocation2 + $0x248] sm:$0xff]
    %v153 = vld [vmem:[#allocation2 + $0x250] sm:$0xff]
    %v154 = vld [vmem:[#allocation2 + $0x258] sm:$0xff]
    %v155 = vld [vmem:[#allocation2 + $0x260] sm:$0xff]
    %v156 = vld [vmem:[#allocation2 + $0x268] sm:$0xff]
    %v157 = vld [vmem:[#allocation2 + $0x270] sm:$0xff]
    %v158 = vld [vmem:[#allocation2 + $0x278] sm:$0xff]
    %v159 = vld [vmem:[#allocation2 + $0x280] sm:$0xff]
    %v160 = vld [vmem:[#allocation2 + $0x288] sm:$0xff]
    %v161 = vld [vmem:[#allocation2 + $0x290] sm:$0xff]
    %v162 = vld [vmem:[#allocation2 + $0x298] sm:$0xff]
    %v163 = vld [vmem:[#allocation2 + $0x2a0] sm:$0xff]
    %v164 = vld [vmem:[#allocation2 + $0x2a8] sm:$0xff]
    %v165 = vld [vmem:[#allocation2 + $0x2b0] sm:$0xff]
    %v166 = vld [vmem:[#allocation2 + $0x2b8] sm:$0xff]
    %v167 = vld [vmem:[#allocation2 + $0x2c0] sm:$0xff]
    %v168 = vld [vmem:[#allocation2 + $0x2c8] sm:$0xff]
    %v169 = vld [vmem:[#allocation2 + $0x2d0] sm:$0xff]
    %v170 = vld [vmem:[#allocation2 + $0x2d8] sm:$0xff]
    %v171 = vld [vmem:[#allocation2 + $0x2e0] sm:$0xff]
    %v172 = vld [vmem:[#allocation2 + $0x2e8] sm:$0xff]
    %v173 = vld [vmem:[#allocation2 + $0x2f0] sm:$0xff]
    %v174 = vld [vmem:[#allocation2 + $0x2f8] sm:$0xff]
    %v175 = vld [vmem:[#allocation2 + $0x300] sm:$0xff]
    %v176 = vld [vmem:[#allocation2 + $0x308] sm:$0xff]
    %v177 = vld [vmem:[#allocation2 + $0x310] sm:$0xff]
    %v178 = vld [vmem:[#allocation2 + $0x318] sm:$0xff]
    %v179 = vld [vmem:[#allocation2 + $0x320] sm:$0xff]
    %v180 = vld [vmem:[#allocation2 + $0x328] sm:$0xff]
    %v181 = vld [vmem:[#allocation2 + $0x330] sm:$0xff]
    %v182 = vld [vmem:[#allocation2 + $0x338] sm:$0xff]
    %v183 = vld [vmem:[#allocation2 + $0x340] sm:$0xff]
    %v184 = vld [vmem:[#allocation2 + $0x348] sm:$0xff]
    %v185 = vld [vmem:[#allocation2 + $0x350] sm:$0xff]
    %v186 = vld [vmem:[#allocation2 + $0x358] sm:$0xff]
    %v187 = vld [vmem:[#allocation2 + $0x360] sm:$0xff]
    %v188 = vld [vmem:[#allocation2 + $0x368] sm:$0xff]
    %v189 = vld [vmem:[#allocation2 + $0x370] sm:$0xff]
    %v190 = vld [vmem:[#allocation2 + $0x378] sm:$0xff]
    %v191 = vld [vmem:[#allocation2 + $0x380] sm:$0xff]
    %v192 = vld [vmem:[#allocation2 + $0x388] sm:$0xff]
    %v193 = vld [vmem:[#allocation2 + $0x390] sm:$0xff]
    %v194 = vld [vmem:[#allocation2 + $0x398] sm:$0xff]
    %v195 = vld [vmem:[#allocation2 + $0x3a0] sm:$0xff]
    %v196 = vld [vmem:[#allocation2 + $0x3a8] sm:$0xff]
    %v197 = vld [vmem:[#allocation2 + $0x3b0] sm:$0xff]
    %v198 = vld [vmem:[#allocation2 + $0x3b8] sm:$0xff]
    %v199 = vld [vmem:[#allocation2 + $0x3c0] sm:$0xff]
    %v200 = vld [vmem:[#allocation2 + $0x3c8] sm:$0xff]
    %v201 = vld [vmem:[#allocation2 + $0x3d0] sm:$0xff]
    %v202 = vld [vmem:[#allocation2 + $0x3d8] sm:$0xff]
    %v203 = vld [vmem:[#allocation2 + $0x3e0] sm:$0xff]
    %v204 = vld [vmem:[#allocation2 + $0x3e8] sm:$0xff]
    %v205 = vld [vmem:[#allocation2 + $0x3f0] sm:$0xff]
    %v206 = vld [vmem:[#allocation2 + $0x3f8] sm:$0xff]
    %v207 = vld [vmem:[#allocation2 + $0x400] sm:$0xff]
    %v208 = vld [vmem:[#allocation2 + $0x408] sm:$0xff]
    %v209 = vld [vmem:[#allocation2 + $0x410] sm:$0xff]
    %v210 = vld [vmem:[#allocation2 + $0x418] sm:$0xff]
    %v211 = vld [vmem:[#allocation2 + $0x420] sm:$0xff]
    %v212 = vld [vmem:[#allocation2 + $0x428] sm:$0xff]
    %v213 = vld [vmem:[#allocation2 + $0x430] sm:$0xff]
    %v214 = vld [vmem:[#allocation2 + $0x438] sm:$0xff]
    %v215 = vld [vmem:[#allocation2 + $0x440] sm:$0xff]
    %v216 = vld [vmem:[#allocation2 + $0x448] sm:$0xff]
    %v217 = vld [vmem:[#allocation2 + $0x450] sm:$0xff]
    %v218 = vld [vmem:[#allocation2 + $0x458] sm:$0xff]
    %v219 = vld [vmem:[#allocation2 + $0x460] sm:$0xff]
    %v220 = vld [vmem:[#allocation2 + $0x468] sm:$0xff]
    %v221 = vld [vmem:[#allocation2 + $0x470] sm:$0xff]
    %v222 = vld [vmem:[#allocation2 + $0x478] sm:$0xff]
    %v223 = vld [vmem:[#allocation2 + $0x480] sm:$0xff]
    %v224 = vld [vmem:[#allocation2 + $0x488] sm:$0xff]
    %v225 = vld [vmem:[#allocation2 + $0x490] sm:$0xff]
    %v226 = vld [vmem:[#allocation2 + $0x498] sm:$0xff]
    %v227 = vld [vmem:[#allocation2 + $0x4a0] sm:$0xff]
    %v228 = vld [vmem:[#allocation2 + $0x4a8] sm:$0xff]
    %v229 = vld [vmem:[#allocation2 + $0x4b0] sm:$0xff]
    %v230 = vld [vmem:[#allocation2 + $0x4b8] sm:$0xff]
    %v231 = vld [vmem:[#allocation2 + $0x4c0] sm:$0xff]
    %v232 = vld [vmem:[#allocation2 + $0x4c8] sm:$0xff]
    %v233 = vld [vmem:[#allocation2 + $0x4d0] sm:$0xff]
    %v234 = vld [vmem:[#allocation2 + $0x4d8] sm:$0xff]
    %v235 = vld [vmem:[#allocation2 + $0x4e0] sm:$0xff]
    %v236 = vld [vmem:[#allocation2 + $0x4e8] sm:$0xff]
    %v237 = vld [vmem:[#allocation2 + $0x4f0] sm:$0xff]
    %v238 = vld [vmem:[#allocation2 + $0x4f8] sm:$0xff]
    %v239 = vld [vmem:[#allocation2 + $0x500] sm:$0xff]
    %v240 = vld [vmem:[#allocation2 + $0x508] sm:$0xff]
    %v241 = vld [vmem:[#allocation2 + $0x510] sm:$0xff]
    %v242 = vld [vmem:[#allocation2 + $0x518] sm:$0xff]
    %v243 = vld [vmem:[#allocation2 + $0x520] sm:$0xff]
    %v244 = vld [vmem:[#allocation2 + $0x528] sm:$0xff]
    %v245 = vld [vmem:[#allocation2 + $0x530] sm:$0xff]
    %v246 = vld [vmem:[#allocation2 + $0x538] sm:$0xff]
    %v247 = vld [vmem:[#allocation2 + $0x540] sm:$0xff]
    %v248 = vld [vmem:[#allocation2 + $0x548] sm:$0xff]
    %v249 = vld [vmem:[#allocation2 + $0x550] sm:$0xff]
    %v250 = vld [vmem:[#allocation2 + $0x558] sm:$0xff]
    %v251 = vld [vmem:[#allocation2 + $0x560] sm:$0xff]
    %v252 = vld [vmem:[#allocation2 + $0x568] sm:$0xff]
    %v253 = vld [vmem:[#allocation2 + $0x570] sm:$0xff]
    %v254 = vld [vmem:[#allocation2 + $0x578] sm:$0xff]
    %v255 = vld [vmem:[#allocation2 + $0x580] sm:$0xff]
    %v256 = vld [vmem:[#allocation2 + $0x588] sm:$0xff]
    %v257 = vld [vmem:[#allocation2 + $0x590] sm:$0xff]
    %v258 = vld [vmem:[#allocation2 + $0x598] sm:$0xff]
    %v259 = vld [vmem:[#allocation2 + $0x5a0] sm:$0xff]
    %v260 = vld [vmem:[#allocation2 + $0x5a8] sm:$0xff]
    %v261 = vld [vmem:[#allocation2 + $0x5b0] sm:$0xff]
    %v262 = vld [vmem:[#allocation2 + $0x5b8] sm:$0xff]
    %v263 = vld [vmem:[#allocation2 + $0x5c0] sm:$0xff]
    %v264 = vld [vmem:[#allocation2 + $0x5c8] sm:$0xff]
    %v265 = vld [vmem:[#allocation2 + $0x5d0] sm:$0xff]
    %v266 = vld [vmem:[#allocation2 + $0x5d8] sm:$0xff]
    %v267 = vld [vmem:[#allocation2 + $0x5e0] sm:$0xff]
    %v268 = vld [vmem:[#allocation2 + $0x5e8] sm:$0xff]
    %v269 = vld [vmem:[#allocation2 + $0x5f0] sm:$0xff]
    %v270 = vld [vmem:[#allocation2 + $0x5f8] sm:$0xff]
    %v463 = vunpack.c.l.b16 %v79
    %v464 = vunpack.c.h.b16 %v79
    %v465 = vunpack.c.l.b16 %v80
    %v466 = vunpack.c.h.b16 %v80
    %v467 = vunpack.c.l.b16 %v81
    %v468 = vunpack.c.h.b16 %v81
    %v469 = vunpack.c.l.b16 %v82
    %v470 = vunpack.c.h.b16 %v82
    %v471 = vunpack.c.l.b16 %v83
    %v472 = vunpack.c.h.b16 %v83
    %v473 = vunpack.c.l.b16 %v84
    %v474 = vunpack.c.h.b16 %v84
    %v475 = vunpack.c.l.b16 %v85
    %v476 = vunpack.c.h.b16 %v85
    %v477 = vunpack.c.l.b16 %v86
    %v478 = vunpack.c.h.b16 %v86
    %v479 = vunpack.c.l.b16 %v87
    %v480 = vunpack.c.h.b16 %v87
    %v481 = vunpack.c.l.b16 %v88
    %v482 = vunpack.c.h.b16 %v88
    %v483 = vunpack.c.l.b16 %v89
    %v484 = vunpack.c.h.b16 %v89
    %v485 = vunpack.c.l.b16 %v90
    %v486 = vunpack.c.h.b16 %v90
    %v487 = vunpack.c.l.b16 %v91
    %v488 = vunpack.c.h.b16 %v91
    %v489 = vunpack.c.l.b16 %v92
    %v490 = vunpack.c.h.b16 %v92
    %v491 = vunpack.c.l.b16 %v93
    %v492 = vunpack.c.h.b16 %v93
    %v493 = vunpack.c.l.b16 %v94
    %v494 = vunpack.c.h.b16 %v94
    %v495 = vunpack.c.l.b16 %v95
    %v496 = vunpack.c.h.b16 %v95
    %v497 = vunpack.c.l.b16 %v96
    %v498 = vunpack.c.h.b16 %v96
    %v499 = vunpack.c.l.b16 %v97
    %v500 = vunpack.c.h.b16 %v97
    %v501 = vunpack.c.l.b16 %v98
    %v502 = vunpack.c.h.b16 %v98
    %v503 = vunpack.c.l.b16 %v99
    %v504 = vunpack.c.h.b16 %v99
    %v505 = vunpack.c.l.b16 %v100
    %v506 = vunpack.c.h.b16 %v100
    %v507 = vunpack.c.l.b16 %v101
    %v508 = vunpack.c.h.b16 %v101
    %v509 = vunpack.c.l.b16 %v102
    %v510 = vunpack.c.h.b16 %v102
    %v511 = vunpack.c.l.b16 %v103
    %v512 = vunpack.c.h.b16 %v103
    %v513 = vunpack.c.l.b16 %v104
    %v514 = vunpack.c.h.b16 %v104
    %v515 = vunpack.c.l.b16 %v105
    %v516 = vunpack.c.h.b16 %v105
    %v517 = vunpack.c.l.b16 %v106
    %v518 = vunpack.c.h.b16 %v106
    %v519 = vunpack.c.l.b16 %v107
    %v520 = vunpack.c.h.b16 %v107
    %v521 = vunpack.c.l.b16 %v108
    %v522 = vunpack.c.h.b16 %v108
    %v523 = vunpack.c.l.b16 %v109
    %v524 = vunpack.c.h.b16 %v109
    %v525 = vunpack.c.l.b16 %v110
    %v526 = vunpack.c.h.b16 %v110
    %v527 = vunpack.c.l.b16 %v111
    %v528 = vunpack.c.h.b16 %v111
    %v529 = vunpack.c.l.b16 %v112
    %v530 = vunpack.c.h.b16 %v112
    %v531 = vunpack.c.l.b16 %v113
    %v532 = vunpack.c.h.b16 %v113
    %v533 = vunpack.c.l.b16 %v114
    %v534 = vunpack.c.h.b16 %v114
    %v535 = vunpack.c.l.b16 %v115
    %v536 = vunpack.c.h.b16 %v115
    %v537 = vunpack.c.l.b16 %v116
    %v538 = vunpack.c.h.b16 %v116
    %v539 = vunpack.c.l.b16 %v117
    %v540 = vunpack.c.h.b16 %v117
    %v541 = vunpack.c.l.b16 %v118
    %v542 = vunpack.c.h.b16 %v118
    %v543 = vunpack.c.l.b16 %v119
    %v544 = vunpack.c.h.b16 %v119
    %v545 = vunpack.c.l.b16 %v120
    %v546 = vunpack.c.h.b16 %v120
    %v547 = vunpack.c.l.b16 %v121
    %v548 = vunpack.c.h.b16 %v121
    %v549 = vunpack.c.l.b16 %v122
    %v550 = vunpack.c.h.b16 %v122
    %v551 = vunpack.c.l.b16 %v123
    %v552 = vunpack.c.h.b16 %v123
    %v553 = vunpack.c.l.b16 %v124
    %v554 = vunpack.c.h.b16 %v124
    %v555 = vunpack.c.l.b16 %v125
    %v556 = vunpack.c.h.b16 %v125
    %v557 = vunpack.c.l.b16 %v126
    %v558 = vunpack.c.h.b16 %v126
    %v559 = vunpack.c.l.b16 %v127
    %v560 = vunpack.c.h.b16 %v127
    %v561 = vunpack.c.l.b16 %v128
    %v562 = vunpack.c.h.b16 %v128
    %v563 = vunpack.c.l.b16 %v129
    %v564 = vunpack.c.h.b16 %v129
    %v565 = vunpack.c.l.b16 %v130
    %v566 = vunpack.c.h.b16 %v130
    %v567 = vunpack.c.l.b16 %v131
    %v568 = vunpack.c.h.b16 %v131
    %v569 = vunpack.c.l.b16 %v132
    %v570 = vunpack.c.h.b16 %v132
    %v571 = vunpack.c.l.b16 %v133
    %v572 = vunpack.c.h.b16 %v133
    %v573 = vunpack.c.l.b16 %v134
    %v574 = vunpack.c.h.b16 %v134
    %v575 = vunpack.c.l.b16 %v135
    %v576 = vunpack.c.h.b16 %v135
    %v577 = vunpack.c.l.b16 %v136
    %v578 = vunpack.c.h.b16 %v136
    %v579 = vunpack.c.l.b16 %v137
    %v580 = vunpack.c.h.b16 %v137
    %v581 = vunpack.c.l.b16 %v138
    %v582 = vunpack.c.h.b16 %v138
    %v583 = vunpack.c.l.b16 %v139
    %v584 = vunpack.c.h.b16 %v139
    %v585 = vunpack.c.l.b16 %v140
    %v586 = vunpack.c.h.b16 %v140
    %v587 = vunpack.c.l.b16 %v141
    %v588 = vunpack.c.h.b16 %v141
    %v589 = vunpack.c.l.b16 %v142
    %v590 = vunpack.c.h.b16 %v142
    %v591 = vunpack.c.l.b16 %v143
    %v592 = vunpack.c.h.b16 %v143
    %v593 = vunpack.c.l.b16 %v144
    %v594 = vunpack.c.h.b16 %v144
    %v595 = vunpack.c.l.b16 %v145
    %v596 = vunpack.c.h.b16 %v145
    %v597 = vunpack.c.l.b16 %v146
    %v598 = vunpack.c.h.b16 %v146
    %v599 = vunpack.c.l.b16 %v147
    %v600 = vunpack.c.h.b16 %v147
    %v601 = vunpack.c.l.b16 %v148
    %v602 = vunpack.c.h.b16 %v148
    %v603 = vunpack.c.l.b16 %v149
    %v604 = vunpack.c.h.b16 %v149
    %v605 = vunpack.c.l.b16 %v150
    %v606 = vunpack.c.h.b16 %v150
    %v607 = vunpack.c.l.b16 %v151
    %v608 = vunpack.c.h.b16 %v151
    %v609 = vunpack.c.l.b16 %v152
    %v610 = vunpack.c.h.b16 %v152
    %v611 = vunpack.c.l.b16 %v153
    %v612 = vunpack.c.h.b16 %v153
    %v613 = vunpack.c.l.b16 %v154
    %v614 = vunpack.c.h.b16 %v154
    %v615 = vunpack.c.l.b16 %v155
    %v616 = vunpack.c.h.b16 %v155
    %v617 = vunpack.c.l.b16 %v156
    %v618 = vunpack.c.h.b16 %v156
    %v619 = vunpack.c.l.b16 %v157
    %v620 = vunpack.c.h.b16 %v157
    %v621 = vunpack.c.l.b16 %v158
    %v622 = vunpack.c.h.b16 %v158
    %v623 = vunpack.c.l.b16 %v159
    %v624 = vunpack.c.h.b16 %v159
    %v625 = vunpack.c.l.b16 %v160
    %v626 = vunpack.c.h.b16 %v160
    %v627 = vunpack.c.l.b16 %v161
    %v628 = vunpack.c.h.b16 %v161
    %v629 = vunpack.c.l.b16 %v162
    %v630 = vunpack.c.h.b16 %v162
    %v631 = vunpack.c.l.b16 %v163
    %v632 = vunpack.c.h.b16 %v163
    %v633 = vunpack.c.l.b16 %v164
    %v634 = vunpack.c.h.b16 %v164
    %v635 = vunpack.c.l.b16 %v165
    %v636 = vunpack.c.h.b16 %v165
    %v637 = vunpack.c.l.b16 %v166
    %v638 = vunpack.c.h.b16 %v166
    %v639 = vunpack.c.l.b16 %v167
    %v640 = vunpack.c.h.b16 %v167
    %v641 = vunpack.c.l.b16 %v168
    %v642 = vunpack.c.h.b16 %v168
    %v643 = vunpack.c.l.b16 %v169
    %v644 = vunpack.c.h.b16 %v169
    %v645 = vunpack.c.l.b16 %v170
    %v646 = vunpack.c.h.b16 %v170
    %v647 = vunpack.c.l.b16 %v171
    %v648 = vunpack.c.h.b16 %v171
    %v649 = vunpack.c.l.b16 %v172
    %v650 = vunpack.c.h.b16 %v172
    %v651 = vunpack.c.l.b16 %v173
    %v652 = vunpack.c.h.b16 %v173
    %v653 = vunpack.c.l.b16 %v174
    %v654 = vunpack.c.h.b16 %v174
    %v655 = vunpack.c.l.b16 %v175
    %v656 = vunpack.c.h.b16 %v175
    %v657 = vunpack.c.l.b16 %v176
    %v658 = vunpack.c.h.b16 %v176
    %v659 = vunpack.c.l.b16 %v177
    %v660 = vunpack.c.h.b16 %v177
    %v661 = vunpack.c.l.b16 %v178
    %v662 = vunpack.c.h.b16 %v178
    %v663 = vunpack.c.l.b16 %v179
    %v664 = vunpack.c.h.b16 %v179
    %v665 = vunpack.c.l.b16 %v180
    %v666 = vunpack.c.h.b16 %v180
    %v667 = vunpack.c.l.b16 %v181
    %v668 = vunpack.c.h.b16 %v181
    %v669 = vunpack.c.l.b16 %v182
    %v670 = vunpack.c.h.b16 %v182
    %v671 = vunpack.c.l.b16 %v183
    %v672 = vunpack.c.h.b16 %v183
    %v673 = vunpack.c.l.b16 %v184
    %v674 = vunpack.c.h.b16 %v184
    %v675 = vunpack.c.l.b16 %v185
    %v676 = vunpack.c.h.b16 %v185
    %v677 = vunpack.c.l.b16 %v186
    %v678 = vunpack.c.h.b16 %v186
    %v679 = vunpack.c.l.b16 %v187
    %v680 = vunpack.c.h.b16 %v187
    %v681 = vunpack.c.l.b16 %v188
    %v682 = vunpack.c.h.b16 %v188
    %v683 = vunpack.c.l.b16 %v189
    %v684 = vunpack.c.h.b16 %v189
    %v685 = vunpack.c.l.b16 %v190
    %v686 = vunpack.c.h.b16 %v190
    %v687 = vunpack.c.l.b16 %v191
    %v688 = vunpack.c.h.b16 %v191
    %v689 = vunpack.c.l.b16 %v192
    %v690 = vunpack.c.h.b16 %v192
    %v691 = vunpack.c.l.b16 %v193
    %v692 = vunpack.c.h.b16 %v193
    %v693 = vunpack.c.l.b16 %v194
    %v694 = vunpack.c.h.b16 %v194
    %v695 = vunpack.c.l.b16 %v195
    %v696 = vunpack.c.h.b16 %v195
    %v697 = vunpack.c.l.b16 %v196
    %v698 = vunpack.c.h.b16 %v196
    %v699 = vunpack.c.l.b16 %v197
    %v700 = vunpack.c.h.b16 %v197
    %v701 = vunpack.c.l.b16 %v198
    %v702 = vunpack.c.h.b16 %v198
    %v703 = vunpack.c.l.b16 %v199
    %v704 = vunpack.c.h.b16 %v199
    %v705 = vunpack.c.l.b16 %v200
    %v706 = vunpack.c.h.b16 %v200
    %v707 = vunpack.c.l.b16 %v201
    %v708 = vunpack.c.h.b16 %v201
    %v709 = vunpack.c.l.b16 %v202
    %v710 = vunpack.c.h.b16 %v202
    %v711 = vunpack.c.l.b16 %v203
    %v712 = vunpack.c.h.b16 %v203
    %v713 = vunpack.c.l.b16 %v204
    %v714 = vunpack.c.h.b16 %v204
    %v715 = vunpack.c.l.b16 %v205
    %v716 = vunpack.c.h.b16 %v205
    %v717 = vunpack.c.l.b16 %v206
    %v718 = vunpack.c.h.b16 %v206
    %v719 = vunpack.c.l.b16 %v207
    %v720 = vunpack.c.h.b16 %v207
    %v721 = vunpack.c.l.b16 %v208
    %v722 = vunpack.c.h.b16 %v208
    %v723 = vunpack.c.l.b16 %v209
    %v724 = vunpack.c.h.b16 %v209
    %v725 = vunpack.c.l.b16 %v210
    %v726 = vunpack.c.h.b16 %v210
    %v727 = vunpack.c.l.b16 %v211
    %v728 = vunpack.c.h.b16 %v211
    %v729 = vunpack.c.l.b16 %v212
    %v730 = vunpack.c.h.b16 %v212
    %v731 = vunpack.c.l.b16 %v213
    %v732 = vunpack.c.h.b16 %v213
    %v733 = vunpack.c.l.b16 %v214
    %v734 = vunpack.c.h.b16 %v214
    %v735 = vunpack.c.l.b16 %v215
    %v736 = vunpack.c.h.b16 %v215
    %v737 = vunpack.c.l.b16 %v216
    %v738 = vunpack.c.h.b16 %v216
    %v739 = vunpack.c.l.b16 %v217
    %v740 = vunpack.c.h.b16 %v217
    %v741 = vunpack.c.l.b16 %v218
    %v742 = vunpack.c.h.b16 %v218
    %v743 = vunpack.c.l.b16 %v219
    %v744 = vunpack.c.h.b16 %v219
    %v745 = vunpack.c.l.b16 %v220
    %v746 = vunpack.c.h.b16 %v220
    %v747 = vunpack.c.l.b16 %v221
    %v748 = vunpack.c.h.b16 %v221
    %v749 = vunpack.c.l.b16 %v222
    %v750 = vunpack.c.h.b16 %v222
    %v751 = vunpack.c.l.b16 %v223
    %v752 = vunpack.c.h.b16 %v223
    %v753 = vunpack.c.l.b16 %v224
    %v754 = vunpack.c.h.b16 %v224
    %v755 = vunpack.c.l.b16 %v225
    %v756 = vunpack.c.h.b16 %v225
    %v757 = vunpack.c.l.b16 %v226
    %v758 = vunpack.c.h.b16 %v226
    %v759 = vunpack.c.l.b16 %v227
    %v760 = vunpack.c.h.b16 %v227
    %v761 = vunpack.c.l.b16 %v228
    %v762 = vunpack.c.h.b16 %v228
    %v763 = vunpack.c.l.b16 %v229
    %v764 = vunpack.c.h.b16 %v229
    %v765 = vunpack.c.l.b16 %v230
    %v766 = vunpack.c.h.b16 %v230
    %v767 = vunpack.c.l.b16 %v231
    %v768 = vunpack.c.h.b16 %v231
    %v769 = vunpack.c.l.b16 %v232
    %v770 = vunpack.c.h.b16 %v232
    %v771 = vunpack.c.l.b16 %v233
    %v772 = vunpack.c.h.b16 %v233
    %v773 = vunpack.c.l.b16 %v234
    %v774 = vunpack.c.h.b16 %v234
    %v775 = vunpack.c.l.b16 %v235
    %v776 = vunpack.c.h.b16 %v235
    %v777 = vunpack.c.l.b16 %v236
    %v778 = vunpack.c.h.b16 %v236
    %v779 = vunpack.c.l.b16 %v237
    %v780 = vunpack.c.h.b16 %v237
    %v781 = vunpack.c.l.b16 %v238
    %v782 = vunpack.c.h.b16 %v238
    %v783 = vunpack.c.l.b16 %v239
    %v784 = vunpack.c.h.b16 %v239
    %v785 = vunpack.c.l.b16 %v240
    %v786 = vunpack.c.h.b16 %v240
    %v787 = vunpack.c.l.b16 %v241
    %v788 = vunpack.c.h.b16 %v241
    %v789 = vunpack.c.l.b16 %v242
    %v790 = vunpack.c.h.b16 %v242
    %v791 = vunpack.c.l.b16 %v243
    %v792 = vunpack.c.h.b16 %v243
    %v793 = vunpack.c.l.b16 %v244
    %v794 = vunpack.c.h.b16 %v244
    %v795 = vunpack.c.l.b16 %v245
    %v796 = vunpack.c.h.b16 %v245
    %v797 = vunpack.c.l.b16 %v246
    %v798 = vunpack.c.h.b16 %v246
    %v799 = vunpack.c.l.b16 %v247
    %v800 = vunpack.c.h.b16 %v247
    %v801 = vunpack.c.l.b16 %v248
    %v802 = vunpack.c.h.b16 %v248
    %v803 = vunpack.c.l.b16 %v249
    %v804 = vunpack.c.h.b16 %v249
    %v805 = vunpack.c.l.b16 %v250
    %v806 = vunpack.c.h.b16 %v250
    %v807 = vunpack.c.l.b16 %v251
    %v808 = vunpack.c.h.b16 %v251
    %v809 = vunpack.c.l.b16 %v252
    %v810 = vunpack.c.h.b16 %v252
    %v811 = vunpack.c.l.b16 %v253
    %v812 = vunpack.c.h.b16 %v253
    %v813 = vunpack.c.l.b16 %v254
    %v814 = vunpack.c.h.b16 %v254
    %v815 = vunpack.c.l.b16 %v255
    %v816 = vunpack.c.h.b16 %v255
    %v817 = vunpack.c.l.b16 %v256
    %v818 = vunpack.c.h.b16 %v256
    %v819 = vunpack.c.l.b16 %v257
    %v820 = vunpack.c.h.b16 %v257
    %v821 = vunpack.c.l.b16 %v258
    %v822 = vunpack.c.h.b16 %v258
    %v823 = vunpack.c.l.b16 %v259
    %v824 = vunpack.c.h.b16 %v259
    %v825 = vunpack.c.l.b16 %v260
    %v826 = vunpack.c.h.b16 %v260
    %v827 = vunpack.c.l.b16 %v261
    %v828 = vunpack.c.h.b16 %v261
    %v829 = vunpack.c.l.b16 %v262
    %v830 = vunpack.c.h.b16 %v262
    %v831 = vunpack.c.l.b16 %v263
    %v832 = vunpack.c.h.b16 %v263
    %v833 = vunpack.c.l.b16 %v264
    %v834 = vunpack.c.h.b16 %v264
    %v835 = vunpack.c.l.b16 %v265
    %v836 = vunpack.c.h.b16 %v265
    %v837 = vunpack.c.l.b16 %v266
    %v838 = vunpack.c.h.b16 %v266
    %v839 = vunpack.c.l.b16 %v267
    %v840 = vunpack.c.h.b16 %v267
    %v841 = vunpack.c.l.b16 %v268
    %v842 = vunpack.c.h.b16 %v268
    %v843 = vunpack.c.l.b16 %v269
    %v844 = vunpack.c.h.b16 %v269
    %v845 = vunpack.c.l.b16 %v270
    %v846 = vunpack.c.h.b16 %v270
    %v847 = vpack.c.b16 %v467, %v463
    %v848 = vpack.c.b16 %v468, %v464
    %v849 = vpack.c.b16 %v469, %v465
    %v850 = vpack.c.b16 %v470, %v466
    %v851 = vpack.c.b16 %v475, %v471
    %v852 = vpack.c.b16 %v476, %v472
    %v853 = vpack.c.b16 %v477, %v473
    %v854 = vpack.c.b16 %v478, %v474
    %v855 = vpack.c.b16 %v483, %v479
    %v856 = vpack.c.b16 %v484, %v480
    %v857 = vpack.c.b16 %v485, %v481
    %v858 = vpack.c.b16 %v486, %v482
    %v859 = vpack.c.b16 %v491, %v487
    %v860 = vpack.c.b16 %v492, %v488
    %v861 = vpack.c.b16 %v493, %v489
    %v862 = vpack.c.b16 %v494, %v490
    %v863 = vpack.c.b16 %v499, %v495
    %v864 = vpack.c.b16 %v500, %v496
    %v865 = vpack.c.b16 %v501, %v497
    %v866 = vpack.c.b16 %v502, %v498
    %v867 = vpack.c.b16 %v507, %v503
    %v868 = vpack.c.b16 %v508, %v504
    %v869 = vpack.c.b16 %v509, %v505
    %v870 = vpack.c.b16 %v510, %v506
    %v871 = vpack.c.b16 %v515, %v511
    %v872 = vpack.c.b16 %v516, %v512
    %v873 = vpack.c.b16 %v517, %v513
    %v874 = vpack.c.b16 %v518, %v514
    %v875 = vpack.c.b16 %v523, %v519
    %v876 = vpack.c.b16 %v524, %v520
    %v877 = vpack.c.b16 %v525, %v521
    %v878 = vpack.c.b16 %v526, %v522
    %v879 = vpack.c.b16 %v531, %v527
    %v880 = vpack.c.b16 %v532, %v528
    %v881 = vpack.c.b16 %v533, %v529
    %v882 = vpack.c.b16 %v534, %v530
    %v883 = vpack.c.b16 %v539, %v535
    %v884 = vpack.c.b16 %v540, %v536
    %v885 = vpack.c.b16 %v541, %v537
    %v886 = vpack.c.b16 %v542, %v538
    %v887 = vpack.c.b16 %v547, %v543
    %v888 = vpack.c.b16 %v548, %v544
    %v889 = vpack.c.b16 %v549, %v545
    %v890 = vpack.c.b16 %v550, %v546
    %v891 = vpack.c.b16 %v555, %v551
    %v892 = vpack.c.b16 %v556, %v552
    %v893 = vpack.c.b16 %v557, %v553
    %v894 = vpack.c.b16 %v558, %v554
    %v895 = vpack.c.b16 %v563, %v559
    %v896 = vpack.c.b16 %v564, %v560
    %v897 = vpack.c.b16 %v565, %v561
    %v898 = vpack.c.b16 %v566, %v562
    %v899 = vpack.c.b16 %v571, %v567
    %v900 = vpack.c.b16 %v572, %v568
    %v901 = vpack.c.b16 %v573, %v569
    %v902 = vpack.c.b16 %v574, %v570
    %v903 = vpack.c.b16 %v579, %v575
    %v904 = vpack.c.b16 %v580, %v576
    %v905 = vpack.c.b16 %v581, %v577
    %v906 = vpack.c.b16 %v582, %v578
    %v907 = vpack.c.b16 %v587, %v583
    %v908 = vpack.c.b16 %v588, %v584
    %v909 = vpack.c.b16 %v589, %v585
    %v910 = vpack.c.b16 %v590, %v586
    %v911 = vpack.c.b16 %v595, %v591
    %v912 = vpack.c.b16 %v596, %v592
    %v913 = vpack.c.b16 %v597, %v593
    %v914 = vpack.c.b16 %v598, %v594
    %v915 = vpack.c.b16 %v603, %v599
    %v916 = vpack.c.b16 %v604, %v600
    %v917 = vpack.c.b16 %v605, %v601
    %v918 = vpack.c.b16 %v606, %v602
    %v919 = vpack.c.b16 %v611, %v607
    %v920 = vpack.c.b16 %v612, %v608
    %v921 = vpack.c.b16 %v613, %v609
    %v922 = vpack.c.b16 %v614, %v610
    %v923 = vpack.c.b16 %v619, %v615
    %v924 = vpack.c.b16 %v620, %v616
    %v925 = vpack.c.b16 %v621, %v617
    %v926 = vpack.c.b16 %v622, %v618
    %v927 = vpack.c.b16 %v627, %v623
    %v928 = vpack.c.b16 %v628, %v624
    %v929 = vpack.c.b16 %v629, %v625
    %v930 = vpack.c.b16 %v630, %v626
    %v931 = vpack.c.b16 %v635, %v631
    %v932 = vpack.c.b16 %v636, %v632
    %v933 = vpack.c.b16 %v637, %v633
    %v934 = vpack.c.b16 %v638, %v634
    %v935 = vpack.c.b16 %v643, %v639
    %v936 = vpack.c.b16 %v644, %v640
    %v937 = vpack.c.b16 %v645, %v641
    %v938 = vpack.c.b16 %v646, %v642
    %v939 = vpack.c.b16 %v651, %v647
    %v940 = vpack.c.b16 %v652, %v648
    %v941 = vpack.c.b16 %v653, %v649
    %v942 = vpack.c.b16 %v654, %v650
    %v943 = vpack.c.b16 %v659, %v655
    %v944 = vpack.c.b16 %v660, %v656
    %v945 = vpack.c.b16 %v661, %v657
    %v946 = vpack.c.b16 %v662, %v658
    %v947 = vpack.c.b16 %v667, %v663
    %v948 = vpack.c.b16 %v668, %v664
    %v949 = vpack.c.b16 %v669, %v665
    %v950 = vpack.c.b16 %v670, %v666
    %v951 = vpack.c.b16 %v675, %v671
    %v952 = vpack.c.b16 %v676, %v672
    %v953 = vpack.c.b16 %v677, %v673
    %v954 = vpack.c.b16 %v678, %v674
    %v955 = vpack.c.b16 %v683, %v679
    %v956 = vpack.c.b16 %v684, %v680
    %v957 = vpack.c.b16 %v685, %v681
    %v958 = vpack.c.b16 %v686, %v682
    %v959 = vpack.c.b16 %v691, %v687
    %v960 = vpack.c.b16 %v692, %v688
    %v961 = vpack.c.b16 %v693, %v689
    %v962 = vpack.c.b16 %v694, %v690
    %v963 = vpack.c.b16 %v699, %v695
    %v964 = vpack.c.b16 %v700, %v696
    %v965 = vpack.c.b16 %v701, %v697
    %v966 = vpack.c.b16 %v702, %v698
    %v967 = vpack.c.b16 %v707, %v703
    %v968 = vpack.c.b16 %v708, %v704
    %v969 = vpack.c.b16 %v709, %v705
    %v970 = vpack.c.b16 %v710, %v706
    %v971 = vpack.c.b16 %v715, %v711
    %v972 = vpack.c.b16 %v716, %v712
    %v973 = vpack.c.b16 %v717, %v713
    %v974 = vpack.c.b16 %v718, %v714
    %v975 = vpack.c.b16 %v723, %v719
    %v976 = vpack.c.b16 %v724, %v720
    %v977 = vpack.c.b16 %v725, %v721
    %v978 = vpack.c.b16 %v726, %v722
    %v979 = vpack.c.b16 %v731, %v727
    %v980 = vpack.c.b16 %v732, %v728
    %v981 = vpack.c.b16 %v733, %v729
    %v982 = vpack.c.b16 %v734, %v730
    %v983 = vpack.c.b16 %v739, %v735
    %v984 = vpack.c.b16 %v740, %v736
    %v985 = vpack.c.b16 %v741, %v737
    %v986 = vpack.c.b16 %v742, %v738
    %v987 = vpack.c.b16 %v747, %v743
    %v988 = vpack.c.b16 %v748, %v744
    %v989 = vpack.c.b16 %v749, %v745
    %v990 = vpack.c.b16 %v750, %v746
    %v991 = vpack.c.b16 %v755, %v751
    %v992 = vpack.c.b16 %v756, %v752
    %v993 = vpack.c.b16 %v757, %v753
    %v994 = vpack.c.b16 %v758, %v754
    %v995 = vpack.c.b16 %v763, %v759
    %v996 = vpack.c.b16 %v764, %v760
    %v997 = vpack.c.b16 %v765, %v761
    %v998 = vpack.c.b16 %v766, %v762
    %v999 = vpack.c.b16 %v771, %v767
    %v1000 = vpack.c.b16 %v772, %v768
    %v1001 = vpack.c.b16 %v773, %v769
    %v1002 = vpack.c.b16 %v774, %v770
    %v1003 = vpack.c.b16 %v779, %v775
    %v1004 = vpack.c.b16 %v780, %v776
    %v1005 = vpack.c.b16 %v781, %v777
    %v1006 = vpack.c.b16 %v782, %v778
    %v1007 = vpack.c.b16 %v787, %v783
    %v1008 = vpack.c.b16 %v788, %v784
    %v1009 = vpack.c.b16 %v789, %v785
    %v1010 = vpack.c.b16 %v790, %v786
    %v1011 = vpack.c.b16 %v795, %v791
    %v1012 = vpack.c.b16 %v796, %v792
    %v1013 = vpack.c.b16 %v797, %v793
    %v1014 = vpack.c.b16 %v798, %v794
    %v1015 = vpack.c.b16 %v803, %v799
    %v1016 = vpack.c.b16 %v804, %v800
    %v1017 = vpack.c.b16 %v805, %v801
    %v1018 = vpack.c.b16 %v806, %v802
    %v1019 = vpack.c.b16 %v811, %v807
    %v1020 = vpack.c.b16 %v812, %v808
    %v1021 = vpack.c.b16 %v813, %v809
    %v1022 = vpack.c.b16 %v814, %v810
    %v1023 = vpack.c.b16 %v819, %v815
    %v1024 = vpack.c.b16 %v820, %v816
    %v1025 = vpack.c.b16 %v821, %v817
    %v1026 = vpack.c.b16 %v822, %v818
    %v1027 = vpack.c.b16 %v827, %v823
    %v1028 = vpack.c.b16 %v828, %v824
    %v1029 = vpack.c.b16 %v829, %v825
    %v1030 = vpack.c.b16 %v830, %v826
    %v1031 = vpack.c.b16 %v835, %v831
    %v1032 = vpack.c.b16 %v836, %v832
    %v1033 = vpack.c.b16 %v837, %v833
    %v1034 = vpack.c.b16 %v838, %v834
    %v1035 = vpack.c.b16 %v843, %v839
    %v1036 = vpack.c.b16 %v844, %v840
    %v1037 = vpack.c.b16 %v845, %v841
    %v1038 = vpack.c.b16 %v846, %v842
    %1231 = vmatpush.bf16.msra.mxu0 %v875
    %1232 = vmatpush.bf16.msra.mxu0 %v871
    %1233 = vmatpush.bf16.msra.mxu0 %v867
    %1234 = vmatpush.bf16.msra.mxu0 %v863
    %1235 = vmatpush.bf16.msra.mxu0 %v859
    %1236 = vmatpush.bf16.msra.mxu0 %v855
    %1237 = vmatpush.bf16.msra.mxu0 %v851
    %1238 = vmatpush.bf16.msra.mxu0 %v847
    %1239 = vmatmul.bf16.gmra.mxu0 %v73
    %v1240 = vpop.f32.mrf.mxu0
    %v1241 = vadd.f32 0.0, %v1240
    %v1242 = vpop.f32.mrf.mxu0
    %1243 = vdwg.mxu0
    %1244 = vmatpush.bf16.msra.mxu0 %v907
    %1245 = vmatpush.bf16.msra.mxu0 %v903
    %1246 = vmatpush.bf16.msra.mxu0 %v899
    %1247 = vmatpush.bf16.msra.mxu0 %v895
    %1248 = vmatpush.bf16.msra.mxu0 %v891
    %1249 = vmatpush.bf16.msra.mxu0 %v887
    %1250 = vmatpush.bf16.msra.mxu0 %v883
    %1251 = vmatpush.bf16.msra.mxu0 %v879
    %1252 = vmatmul.bf16.gmra.mxu0 %v74
    %v1253 = vpop.f32.mrf.mxu0
    %v1254 = vadd.f32 %v1241, %v1253
    %v1255 = vpop.f32.mrf.mxu0
    %1256 = vdwg.mxu0
    %1257 = vmatpush.bf16.msra.mxu0 %v939
    %1258 = vmatpush.bf16.msra.mxu0 %v935
    %1259 = vmatpush.bf16.msra.mxu0 %v931
    %1260 = vmatpush.bf16.msra.mxu0 %v927
    %1261 = vmatpush.bf16.msra.mxu0 %v923
    %1262 = vmatpush.bf16.msra.mxu0 %v919
    %1263 = vmatpush.bf16.msra.mxu0 %v915
    %1264 = vmatpush.bf16.msra.mxu0 %v911
    %1265 = vmatmul.bf16.gmra.mxu0 %v75
    %v1266 = vpop.f32.mrf.mxu0
    %v1267 = vadd.f32 %v1254, %v1266
    %v1268 = vpop.f32.mrf.mxu0
    %1269 = vdwg.mxu0
    %1270 = vmatpush.bf16.msra.mxu0 %v971
    %1271 = vmatpush.bf16.msra.mxu0 %v967
    %1272 = vmatpush.bf16.msra.mxu0 %v963
    %1273 = vmatpush.bf16.msra.mxu0 %v959
    %1274 = vmatpush.bf16.msra.mxu0 %v955
    %1275 = vmatpush.bf16.msra.mxu0 %v951
    %1276 = vmatpush.bf16.msra.mxu0 %v947
    %1277 = vmatpush.bf16.msra.mxu0 %v943
    %1278 = vmatmul.bf16.gmra.mxu0 %v76
    %v1279 = vpop.f32.mrf.mxu0
    %v1280 = vadd.f32 %v1267, %v1279
    %v1281 = vpop.f32.mrf.mxu0
    %1282 = vdwg.mxu0
    %1283 = vmatpush.bf16.msra.mxu0 %v1003
    %1284 = vmatpush.bf16.msra.mxu0 %v999
    %1285 = vmatpush.bf16.msra.mxu0 %v995
    %1286 = vmatpush.bf16.msra.mxu0 %v991
    %1287 = vmatpush.bf16.msra.mxu0 %v987
    %1288 = vmatpush.bf16.msra.mxu0 %v983
    %1289 = vmatpush.bf16.msra.mxu0 %v979
    %1290 = vmatpush.bf16.msra.mxu0 %v975
    %1291 = vmatmul.bf16.gmra.mxu0 %v77
    %v1292 = vpop.f32.mrf.mxu0
    %v1293 = vadd.f32 %v1280, %v1292
    %v1294 = vpop.f32.mrf.mxu0
    %1295 = vdwg.mxu0
    %1296 = vmatpush.bf16.msra.mxu0 %v1035
    %1297 = vmatpush.bf16.msra.mxu0 %v1031
    %1298 = vmatpush.bf16.msra.mxu0 %v1027
    %1299 = vmatpush.bf16.msra.mxu0 %v1023
    %1300 = vmatpush.bf16.msra.mxu0 %v1019
    %1301 = vmatpush.bf16.msra.mxu0 %v1015
    %1302 = vmatpush.bf16.msra.mxu0 %v1011
    %1303 = vmatpush.bf16.msra.mxu0 %v1007
    %1304 = vmatmul.bf16.gmra.mxu0 %v78
    %v1305 = vpop.f32.mrf.mxu0
    %v1306 = vadd.f32 %v1293, %v1305
    %v1307 = vpop.f32.mrf.mxu0
    %1308 = vdwg.mxu0
    %1309 = vmatpush.bf16.msra.mxu0 %v876
    %1310 = vmatpush.bf16.msra.mxu0 %v872
    %1311 = vmatpush.bf16.msra.mxu0 %v868
    %1312 = vmatpush.bf16.msra.mxu0 %v864
    %1313 = vmatpush.bf16.msra.mxu0 %v860
    %1314 = vmatpush.bf16.msra.mxu0 %v856
    %1315 = vmatpush.bf16.msra.mxu0 %v852
    %1316 = vmatpush.bf16.msra.mxu0 %v848
    %1317 = vmatmul.bf16.gmra.mxu0 %v73
    %v1318 = vpop.f32.mrf.mxu0
    %v1319 = vadd.f32 0.0, %v1318
    %v1320 = vpop.f32.mrf.mxu0
    %1321 = vdwg.mxu0
    %1322 = vmatpush.bf16.msra.mxu0 %v908
    %1323 = vmatpush.bf16.msra.mxu0 %v904
    %1324 = vmatpush.bf16.msra.mxu0 %v900
    %1325 = vmatpush.bf16.msra.mxu0 %v896
    %1326 = vmatpush.bf16.msra.mxu0 %v892
    %1327 = vmatpush.bf16.msra.mxu0 %v888
    %1328 = vmatpush.bf16.msra.mxu0 %v884
    %1329 = vmatpush.bf16.msra.mxu0 %v880
    %1330 = vmatmul.bf16.gmra.mxu0 %v74
    %v1331 = vpop.f32.mrf.mxu0
    %v1332 = vadd.f32 %v1319, %v1331
    %v1333 = vpop.f32.mrf.mxu0
    %1334 = vdwg.mxu0
    %1335 = vmatpush.bf16.msra.mxu0 %v940
    %1336 = vmatpush.bf16.msra.mxu0 %v936
    %1337 = vmatpush.bf16.msra.mxu0 %v932
    %1338 = vmatpush.bf16.msra.mxu0 %v928
    %1339 = vmatpush.bf16.msra.mxu0 %v924
    %1340 = vmatpush.bf16.msra.mxu0 %v920
    %1341 = vmatpush.bf16.msra.mxu0 %v916
    %1342 = vmatpush.bf16.msra.mxu0 %v912
    %1343 = vmatmul.bf16.gmra.mxu0 %v75
    %v1344 = vpop.f32.mrf.mxu0
    %v1345 = vadd.f32 %v1332, %v1344
    %v1346 = vpop.f32.mrf.mxu0
    %1347 = vdwg.mxu0
    %1348 = vmatpush.bf16.msra.mxu0 %v972
    %1349 = vmatpush.bf16.msra.mxu0 %v968
    %1350 = vmatpush.bf16.msra.mxu0 %v964
    %1351 = vmatpush.bf16.msra.mxu0 %v960
    %1352 = vmatpush.bf16.msra.mxu0 %v956
    %1353 = vmatpush.bf16.msra.mxu0 %v952
    %1354 = vmatpush.bf16.msra.mxu0 %v948
    %1355 = vmatpush.bf16.msra.mxu0 %v944
    %1356 = vmatmul.bf16.gmra.mxu0 %v76
    %v1357 = vpop.f32.mrf.mxu0
    %v1358 = vadd.f32 %v1345, %v1357
    %v1359 = vpop.f32.mrf.mxu0
    %1360 = vdwg.mxu0
    %1361 = vmatpush.bf16.msra.mxu0 %v1004
    %1362 = vmatpush.bf16.msra.mxu0 %v1000
    %1363 = vmatpush.bf16.msra.mxu0 %v996
    %1364 = vmatpush.bf16.msra.mxu0 %v992
    %1365 = vmatpush.bf16.msra.mxu0 %v988
    %1366 = vmatpush.bf16.msra.mxu0 %v984
    %1367 = vmatpush.bf16.msra.mxu0 %v980
    %1368 = vmatpush.bf16.msra.mxu0 %v976
    %1369 = vmatmul.bf16.gmra.mxu0 %v77
    %v1370 = vpop.f32.mrf.mxu0
    %v1371 = vadd.f32 %v1358, %v1370
    %v1372 = vpop.f32.mrf.mxu0
    %1373 = vdwg.mxu0
    %1374 = vmatpush.bf16.msra.mxu0 %v1036
    %1375 = vmatpush.bf16.msra.mxu0 %v1032
    %1376 = vmatpush.bf16.msra.mxu0 %v1028
    %1377 = vmatpush.bf16.msra.mxu0 %v1024
    %1378 = vmatpush.bf16.msra.mxu0 %v1020
    %1379 = vmatpush.bf16.msra.mxu0 %v1016
    %1380 = vmatpush.bf16.msra.mxu0 %v1012
    %1381 = vmatpush.bf16.msra.mxu0 %v1008
    %1382 = vmatmul.bf16.gmra.mxu0 %v78
    %v1383 = vpop.f32.mrf.mxu0
    %v1384 = vadd.f32 %v1371, %v1383
    %v1385 = vpop.f32.mrf.mxu0
    %1386 = vdwg.mxu0
    %1387 = vmatpush.bf16.msra.mxu0 %v877
    %1388 = vmatpush.bf16.msra.mxu0 %v873
    %1389 = vmatpush.bf16.msra.mxu0 %v869
    %1390 = vmatpush.bf16.msra.mxu0 %v865
    %1391 = vmatpush.bf16.msra.mxu0 %v861
    %1392 = vmatpush.bf16.msra.mxu0 %v857
    %1393 = vmatpush.bf16.msra.mxu0 %v853
    %1394 = vmatpush.bf16.msra.mxu0 %v849
    %1395 = vmatmul.bf16.gmra.mxu0 %v73
    %v1396 = vpop.f32.mrf.mxu0
    %v1397 = vadd.f32 0.0, %v1396
    %v1398 = vpop.f32.mrf.mxu0
    %1399 = vdwg.mxu0
    %1400 = vmatpush.bf16.msra.mxu0 %v909
    %1401 = vmatpush.bf16.msra.mxu0 %v905
    %1402 = vmatpush.bf16.msra.mxu0 %v901
    %1403 = vmatpush.bf16.msra.mxu0 %v897
    %1404 = vmatpush.bf16.msra.mxu0 %v893
    %1405 = vmatpush.bf16.msra.mxu0 %v889
    %1406 = vmatpush.bf16.msra.mxu0 %v885
    %1407 = vmatpush.bf16.msra.mxu0 %v881
    %1408 = vmatmul.bf16.gmra.mxu0 %v74
    %v1409 = vpop.f32.mrf.mxu0
    %v1410 = vadd.f32 %v1397, %v1409
    %v1411 = vpop.f32.mrf.mxu0
    %1412 = vdwg.mxu0
    %1413 = vmatpush.bf16.msra.mxu0 %v941
    %1414 = vmatpush.bf16.msra.mxu0 %v937
    %1415 = vmatpush.bf16.msra.mxu0 %v933
    %1416 = vmatpush.bf16.msra.mxu0 %v929
    %1417 = vmatpush.bf16.msra.mxu0 %v925
    %1418 = vmatpush.bf16.msra.mxu0 %v921
    %1419 = vmatpush.bf16.msra.mxu0 %v917
    %1420 = vmatpush.bf16.msra.mxu0 %v913
    %1421 = vmatmul.bf16.gmra.mxu0 %v75
    %v1422 = vpop.f32.mrf.mxu0
    %v1423 = vadd.f32 %v1410, %v1422
    %v1424 = vpop.f32.mrf.mxu0
    %1425 = vdwg.mxu0
    %1426 = vmatpush.bf16.msra.mxu0 %v973
    %1427 = vmatpush.bf16.msra.mxu0 %v969
    %1428 = vmatpush.bf16.msra.mxu0 %v965
    %1429 = vmatpush.bf16.msra.mxu0 %v961
    %1430 = vmatpush.bf16.msra.mxu0 %v957
    %1431 = vmatpush.bf16.msra.mxu0 %v953
    %1432 = vmatpush.bf16.msra.mxu0 %v949
    %1433 = vmatpush.bf16.msra.mxu0 %v945
    %1434 = vmatmul.bf16.gmra.mxu0 %v76
    %v1435 = vpop.f32.mrf.mxu0
    %v1436 = vadd.f32 %v1423, %v1435
    %v1437 = vpop.f32.mrf.mxu0
    %1438 = vdwg.mxu0
    %1439 = vmatpush.bf16.msra.mxu0 %v1005
    %1440 = vmatpush.bf16.msra.mxu0 %v1001
    %1441 = vmatpush.bf16.msra.mxu0 %v997
    %1442 = vmatpush.bf16.msra.mxu0 %v993
    %1443 = vmatpush.bf16.msra.mxu0 %v989
    %1444 = vmatpush.bf16.msra.mxu0 %v985
    %1445 = vmatpush.bf16.msra.mxu0 %v981
    %1446 = vmatpush.bf16.msra.mxu0 %v977
    %1447 = vmatmul.bf16.gmra.mxu0 %v77
    %v1448 = vpop.f32.mrf.mxu0
    %v1449 = vadd.f32 %v1436, %v1448
    %v1450 = vpop.f32.mrf.mxu0
    %1451 = vdwg.mxu0
    %1452 = vmatpush.bf16.msra.mxu0 %v1037
    %1453 = vmatpush.bf16.msra.mxu0 %v1033
    %1454 = vmatpush.bf16.msra.mxu0 %v1029
    %1455 = vmatpush.bf16.msra.mxu0 %v1025
    %1456 = vmatpush.bf16.msra.mxu0 %v1021
    %1457 = vmatpush.bf16.msra.mxu0 %v1017
    %1458 = vmatpush.bf16.msra.mxu0 %v1013
    %1459 = vmatpush.bf16.msra.mxu0 %v1009
    %1460 = vmatmul.bf16.gmra.mxu0 %v78
    %v1461 = vpop.f32.mrf.mxu0
    %v1462 = vadd.f32 %v1449, %v1461
    %v1463 = vpop.f32.mrf.mxu0
    %1464 = vdwg.mxu0
    %1465 = vmatpush.bf16.msra.mxu0 %v878
    %1466 = vmatpush.bf16.msra.mxu0 %v874
    %1467 = vmatpush.bf16.msra.mxu0 %v870
    %1468 = vmatpush.bf16.msra.mxu0 %v866
    %1469 = vmatpush.bf16.msra.mxu0 %v862
    %1470 = vmatpush.bf16.msra.mxu0 %v858
    %1471 = vmatpush.bf16.msra.mxu0 %v854
    %1472 = vmatpush.bf16.msra.mxu0 %v850
    %1473 = vmatmul.bf16.gmra.mxu0 %v73
    %v1474 = vpop.f32.mrf.mxu0
    %v1475 = vadd.f32 0.0, %v1474
    %v1476 = vpop.f32.mrf.mxu0
    %1477 = vdwg.mxu0
    %1478 = vmatpush.bf16.msra.mxu0 %v910
    %1479 = vmatpush.bf16.msra.mxu0 %v906
    %1480 = vmatpush.bf16.msra.mxu0 %v902
    %1481 = vmatpush.bf16.msra.mxu0 %v898
    %1482 = vmatpush.bf16.msra.mxu0 %v894
    %1483 = vmatpush.bf16.msra.mxu0 %v890
    %1484 = vmatpush.bf16.msra.mxu0 %v886
    %1485 = vmatpush.bf16.msra.mxu0 %v882
    %1486 = vmatmul.bf16.gmra.mxu0 %v74
    %v1487 = vpop.f32.mrf.mxu0
    %v1488 = vadd.f32 %v1475, %v1487
    %v1489 = vpop.f32.mrf.mxu0
    %1490 = vdwg.mxu0
    %1491 = vmatpush.bf16.msra.mxu0 %v942
    %1492 = vmatpush.bf16.msra.mxu0 %v938
    %1493 = vmatpush.bf16.msra.mxu0 %v934
    %1494 = vmatpush.bf16.msra.mxu0 %v930
    %1495 = vmatpush.bf16.msra.mxu0 %v926
    %1496 = vmatpush.bf16.msra.mxu0 %v922
    %1497 = vmatpush.bf16.msra.mxu0 %v918
    %1498 = vmatpush.bf16.msra.mxu0 %v914
    %1499 = vmatmul.bf16.gmra.mxu0 %v75
    %v1500 = vpop.f32.mrf.mxu0
    %v1501 = vadd.f32 %v1488, %v1500
    %v1502 = vpop.f32.mrf.mxu0
    %1503 = vdwg.mxu0
    %1504 = vmatpush.bf16.msra.mxu0 %v974
    %1505 = vmatpush.bf16.msra.mxu0 %v970
    %1506 = vmatpush.bf16.msra.mxu0 %v966
    %1507 = vmatpush.bf16.msra.mxu0 %v962
    %1508 = vmatpush.bf16.msra.mxu0 %v958
    %1509 = vmatpush.bf16.msra.mxu0 %v954
    %1510 = vmatpush.bf16.msra.mxu0 %v950
    %1511 = vmatpush.bf16.msra.mxu0 %v946
    %1512 = vmatmul.bf16.gmra.mxu0 %v76
    %v1513 = vpop.f32.mrf.mxu0
    %v1514 = vadd.f32 %v1501, %v1513
    %v1515 = vpop.f32.mrf.mxu0
    %1516 = vdwg.mxu0
    %1517 = vmatpush.bf16.msra.mxu0 %v1006
    %1518 = vmatpush.bf16.msra.mxu0 %v1002
    %1519 = vmatpush.bf16.msra.mxu0 %v998
    %1520 = vmatpush.bf16.msra.mxu0 %v994
    %1521 = vmatpush.bf16.msra.mxu0 %v990
    %1522 = vmatpush.bf16.msra.mxu0 %v986
    %1523 = vmatpush.bf16.msra.mxu0 %v982
    %1524 = vmatpush.bf16.msra.mxu0 %v978
    %1525 = vmatmul.bf16.gmra.mxu0 %v77
    %v1526 = vpop.f32.mrf.mxu0
    %v1527 = vadd.f32 %v1514, %v1526
    %v1528 = vpop.f32.mrf.mxu0
    %1529 = vdwg.mxu0
    %1530 = vmatpush.bf16.msra.mxu0 %v1038
    %1531 = vmatpush.bf16.msra.mxu0 %v1034
    %1532 = vmatpush.bf16.msra.mxu0 %v1030
    %1533 = vmatpush.bf16.msra.mxu0 %v1026
    %1534 = vmatpush.bf16.msra.mxu0 %v1022
    %1535 = vmatpush.bf16.msra.mxu0 %v1018
    %1536 = vmatpush.bf16.msra.mxu0 %v1014
    %1537 = vmatpush.bf16.msra.mxu0 %v1010
    %1538 = vmatmul.bf16.gmra.mxu0 %v78
    %v1539 = vpop.f32.mrf.mxu0
    %v1540 = vadd.f32 %v1527, %v1539
    %v1541 = vpop.f32.mrf.mxu0
    %1542 = vdwg.mxu0
    %vm1543 = vcmp.gt.f32.partialorder %v1306, 0.0
    %vm1544 = vcmp.gt.f32.partialorder %v1384, 0.0
    %vm1545 = vcmp.gt.f32.partialorder %v1462, 0.0
    %vm1546 = vcmp.gt.f32.partialorder %v1540, 0.0
    %v1547 = vmul.f32 %v1306, 0.2
    %v1548 = vmul.f32 %v1384, 0.2
    %v1549 = vmul.f32 %v1462, 0.2
    %v1550 = vmul.f32 %v1540, 0.2
    %v1551 = vsel %vm1543, %v1306, %v1547
    %v1552 = vsel %vm1544, %v1384, %v1548
    %v1553 = vsel %vm1545, %v1462, %v1549
    %v1554 = vsel %vm1546, %v1540, %v1550
    %v1555 = vpack.c.bf16 %v1551, %v1551
    %v1556 = vpack.c.bf16 %v1552, %v1552
    %v1557 = vpack.c.bf16 %v1553, %v1553
    %v1558 = vpack.c.bf16 %v1554, %v1554
    %v1559 = vld [vmem:[#allocation4] sm:$0xff]
    %v1560 = vld [vmem:[#allocation4 + $0x8] sm:$0xff]
    %v1561 = vld [vmem:[#allocation4 + $0x10] sm:$0xff]
    %v1562 = vld [vmem:[#allocation4 + $0x18] sm:$0xff]
    %v1563 = vld [vmem:[#allocation4 + $0x20] sm:$0xff]
    %v1564 = vld [vmem:[#allocation4 + $0x28] sm:$0xff]
    %v1565 = vld [vmem:[#allocation4 + $0x30] sm:$0xff]
    %v1566 = vld [vmem:[#allocation4 + $0x38] sm:$0xff]
    %v1567 = vld [vmem:[#allocation4 + $0x40] sm:$0xff]
    %v1568 = vld [vmem:[#allocation4 + $0x48] sm:$0xff]
    %v1569 = vld [vmem:[#allocation4 + $0x50] sm:$0xff]
    %v1570 = vld [vmem:[#allocation4 + $0x58] sm:$0xff]
    %v1571 = vld [vmem:[#allocation4 + $0x60] sm:$0xff]
    %v1572 = vld [vmem:[#allocation4 + $0x68] sm:$0xff]
    %v1573 = vld [vmem:[#allocation4 + $0x70] sm:$0xff]
    %v1574 = vld [vmem:[#allocation4 + $0x78] sm:$0xff]
    %v1575 = vld [vmem:[#allocation4 + $0x80] sm:$0xff]
    %v1576 = vld [vmem:[#allocation4 + $0x88] sm:$0xff]
    %v1577 = vld [vmem:[#allocation4 + $0x90] sm:$0xff]
    %v1578 = vld [vmem:[#allocation4 + $0x98] sm:$0xff]
    %v1579 = vld [vmem:[#allocation4 + $0xa0] sm:$0xff]
    %v1580 = vld [vmem:[#allocation4 + $0xa8] sm:$0xff]
    %v1581 = vld [vmem:[#allocation4 + $0xb0] sm:$0xff]
    %v1582 = vld [vmem:[#allocation4 + $0xb8] sm:$0xff]
    %v1583 = vld [vmem:[#allocation4 + $0xc0] sm:$0xff]
    %v1584 = vld [vmem:[#allocation4 + $0xc8] sm:$0xff]
    %v1585 = vld [vmem:[#allocation4 + $0xd0] sm:$0xff]
    %v1586 = vld [vmem:[#allocation4 + $0xd8] sm:$0xff]
    %v1587 = vld [vmem:[#allocation4 + $0xe0] sm:$0xff]
    %v1588 = vld [vmem:[#allocation4 + $0xe8] sm:$0xff]
    %v1589 = vld [vmem:[#allocation4 + $0xf0] sm:$0xff]
    %v1590 = vld [vmem:[#allocation4 + $0xf8] sm:$0xff]
    %v1591 = vld [vmem:[#allocation4 + $0x100] sm:$0xff]
    %v1592 = vld [vmem:[#allocation4 + $0x108] sm:$0xff]
    %v1593 = vld [vmem:[#allocation4 + $0x110] sm:$0xff]
    %v1594 = vld [vmem:[#allocation4 + $0x118] sm:$0xff]
    %v1595 = vld [vmem:[#allocation4 + $0x120] sm:$0xff]
    %v1596 = vld [vmem:[#allocation4 + $0x128] sm:$0xff]
    %v1597 = vld [vmem:[#allocation4 + $0x130] sm:$0xff]
    %v1598 = vld [vmem:[#allocation4 + $0x138] sm:$0xff]
    %v1599 = vld [vmem:[#allocation4 + $0x140] sm:$0xff]
    %v1600 = vld [vmem:[#allocation4 + $0x148] sm:$0xff]
    %v1601 = vld [vmem:[#allocation4 + $0x150] sm:$0xff]
    %v1602 = vld [vmem:[#allocation4 + $0x158] sm:$0xff]
    %v1603 = vld [vmem:[#allocation4 + $0x160] sm:$0xff]
    %v1604 = vld [vmem:[#allocation4 + $0x168] sm:$0xff]
    %v1605 = vld [vmem:[#allocation4 + $0x170] sm:$0xff]
    %v1606 = vld [vmem:[#allocation4 + $0x178] sm:$0xff]
    %v1607 = vld [vmem:[#allocation4 + $0x180] sm:$0xff]
    %v1608 = vld [vmem:[#allocation4 + $0x188] sm:$0xff]
    %v1609 = vld [vmem:[#allocation4 + $0x190] sm:$0xff]
    %v1610 = vld [vmem:[#allocation4 + $0x198] sm:$0xff]
    %v1611 = vld [vmem:[#allocation4 + $0x1a0] sm:$0xff]
    %v1612 = vld [vmem:[#allocation4 + $0x1a8] sm:$0xff]
    %v1613 = vld [vmem:[#allocation4 + $0x1b0] sm:$0xff]
    %v1614 = vld [vmem:[#allocation4 + $0x1b8] sm:$0xff]
    %v1615 = vld [vmem:[#allocation4 + $0x1c0] sm:$0xff]
    %v1616 = vld [vmem:[#allocation4 + $0x1c8] sm:$0xff]
    %v1617 = vld [vmem:[#allocation4 + $0x1d0] sm:$0xff]
    %v1618 = vld [vmem:[#allocation4 + $0x1d8] sm:$0xff]
    %v1619 = vld [vmem:[#allocation4 + $0x1e0] sm:$0xff]
    %v1620 = vld [vmem:[#allocation4 + $0x1e8] sm:$0xff]
    %v1621 = vld [vmem:[#allocation4 + $0x1f0] sm:$0xff]
    %v1622 = vld [vmem:[#allocation4 + $0x1f8] sm:$0xff]
    %v1687 = vunpack.c.l.b16 %v1559
    %v1688 = vunpack.c.h.b16 %v1559
    %v1689 = vunpack.c.l.b16 %v1560
    %v1690 = vunpack.c.h.b16 %v1560
    %v1691 = vunpack.c.l.b16 %v1561
    %v1692 = vunpack.c.h.b16 %v1561
    %v1693 = vunpack.c.l.b16 %v1562
    %v1694 = vunpack.c.h.b16 %v1562
    %v1695 = vunpack.c.l.b16 %v1563
    %v1696 = vunpack.c.h.b16 %v1563
    %v1697 = vunpack.c.l.b16 %v1564
    %v1698 = vunpack.c.h.b16 %v1564
    %v1699 = vunpack.c.l.b16 %v1565
    %v1700 = vunpack.c.h.b16 %v1565
    %v1701 = vunpack.c.l.b16 %v1566
    %v1702 = vunpack.c.h.b16 %v1566
    %v1703 = vunpack.c.l.b16 %v1567
    %v1704 = vunpack.c.h.b16 %v1567
    %v1705 = vunpack.c.l.b16 %v1568
    %v1706 = vunpack.c.h.b16 %v1568
    %v1707 = vunpack.c.l.b16 %v1569
    %v1708 = vunpack.c.h.b16 %v1569
    %v1709 = vunpack.c.l.b16 %v1570
    %v1710 = vunpack.c.h.b16 %v1570
    %v1711 = vunpack.c.l.b16 %v1571
    %v1712 = vunpack.c.h.b16 %v1571
    %v1713 = vunpack.c.l.b16 %v1572
    %v1714 = vunpack.c.h.b16 %v1572
    %v1715 = vunpack.c.l.b16 %v1573
    %v1716 = vunpack.c.h.b16 %v1573
    %v1717 = vunpack.c.l.b16 %v1574
    %v1718 = vunpack.c.h.b16 %v1574
    %v1719 = vunpack.c.l.b16 %v1575
    %v1720 = vunpack.c.h.b16 %v1575
    %v1721 = vunpack.c.l.b16 %v1576
    %v1722 = vunpack.c.h.b16 %v1576
    %v1723 = vunpack.c.l.b16 %v1577
    %v1724 = vunpack.c.h.b16 %v1577
    %v1725 = vunpack.c.l.b16 %v1578
    %v1726 = vunpack.c.h.b16 %v1578
    %v1727 = vunpack.c.l.b16 %v1579
    %v1728 = vunpack.c.h.b16 %v1579
    %v1729 = vunpack.c.l.b16 %v1580
    %v1730 = vunpack.c.h.b16 %v1580
    %v1731 = vunpack.c.l.b16 %v1581
    %v1732 = vunpack.c.h.b16 %v1581
    %v1733 = vunpack.c.l.b16 %v1582
    %v1734 = vunpack.c.h.b16 %v1582
    %v1735 = vunpack.c.l.b16 %v1583
    %v1736 = vunpack.c.h.b16 %v1583
    %v1737 = vunpack.c.l.b16 %v1584
    %v1738 = vunpack.c.h.b16 %v1584
    %v1739 = vunpack.c.l.b16 %v1585
    %v1740 = vunpack.c.h.b16 %v1585
    %v1741 = vunpack.c.l.b16 %v1586
    %v1742 = vunpack.c.h.b16 %v1586
    %v1743 = vunpack.c.l.b16 %v1587
    %v1744 = vunpack.c.h.b16 %v1587
    %v1745 = vunpack.c.l.b16 %v1588
    %v1746 = vunpack.c.h.b16 %v1588
    %v1747 = vunpack.c.l.b16 %v1589
    %v1748 = vunpack.c.h.b16 %v1589
    %v1749 = vunpack.c.l.b16 %v1590
    %v1750 = vunpack.c.h.b16 %v1590
    %v1751 = vunpack.c.l.b16 %v1591
    %v1752 = vunpack.c.h.b16 %v1591
    %v1753 = vunpack.c.l.b16 %v1592
    %v1754 = vunpack.c.h.b16 %v1592
    %v1755 = vunpack.c.l.b16 %v1593
    %v1756 = vunpack.c.h.b16 %v1593
    %v1757 = vunpack.c.l.b16 %v1594
    %v1758 = vunpack.c.h.b16 %v1594
    %v1759 = vunpack.c.l.b16 %v1595
    %v1760 = vunpack.c.h.b16 %v1595
    %v1761 = vunpack.c.l.b16 %v1596
    %v1762 = vunpack.c.h.b16 %v1596
    %v1763 = vunpack.c.l.b16 %v1597
    %v1764 = vunpack.c.h.b16 %v1597
    %v1765 = vunpack.c.l.b16 %v1598
    %v1766 = vunpack.c.h.b16 %v1598
    %v1767 = vunpack.c.l.b16 %v1599
    %v1768 = vunpack.c.h.b16 %v1599
    %v1769 = vunpack.c.l.b16 %v1600
    %v1770 = vunpack.c.h.b16 %v1600
    %v1771 = vunpack.c.l.b16 %v1601
    %v1772 = vunpack.c.h.b16 %v1601
    %v1773 = vunpack.c.l.b16 %v1602
    %v1774 = vunpack.c.h.b16 %v1602
    %v1775 = vunpack.c.l.b16 %v1603
    %v1776 = vunpack.c.h.b16 %v1603
    %v1777 = vunpack.c.l.b16 %v1604
    %v1778 = vunpack.c.h.b16 %v1604
    %v1779 = vunpack.c.l.b16 %v1605
    %v1780 = vunpack.c.h.b16 %v1605
    %v1781 = vunpack.c.l.b16 %v1606
    %v1782 = vunpack.c.h.b16 %v1606
    %v1783 = vunpack.c.l.b16 %v1607
    %v1784 = vunpack.c.h.b16 %v1607
    %v1785 = vunpack.c.l.b16 %v1608
    %v1786 = vunpack.c.h.b16 %v1608
    %v1787 = vunpack.c.l.b16 %v1609
    %v1788 = vunpack.c.h.b16 %v1609
    %v1789 = vunpack.c.l.b16 %v1610
    %v1790 = vunpack.c.h.b16 %v1610
    %v1791 = vunpack.c.l.b16 %v1611
    %v1792 = vunpack.c.h.b16 %v1611
    %v1793 = vunpack.c.l.b16 %v1612
    %v1794 = vunpack.c.h.b16 %v1612
    %v1795 = vunpack.c.l.b16 %v1613
    %v1796 = vunpack.c.h.b16 %v1613
    %v1797 = vunpack.c.l.b16 %v1614
    %v1798 = vunpack.c.h.b16 %v1614
    %v1799 = vunpack.c.l.b16 %v1615
    %v1800 = vunpack.c.h.b16 %v1615
    %v1801 = vunpack.c.l.b16 %v1616
    %v1802 = vunpack.c.h.b16 %v1616
    %v1803 = vunpack.c.l.b16 %v1617
    %v1804 = vunpack.c.h.b16 %v1617
    %v1805 = vunpack.c.l.b16 %v1618
    %v1806 = vunpack.c.h.b16 %v1618
    %v1807 = vunpack.c.l.b16 %v1619
    %v1808 = vunpack.c.h.b16 %v1619
    %v1809 = vunpack.c.l.b16 %v1620
    %v1810 = vunpack.c.h.b16 %v1620
    %v1811 = vunpack.c.l.b16 %v1621
    %v1812 = vunpack.c.h.b16 %v1621
    %v1813 = vunpack.c.l.b16 %v1622
    %v1814 = vunpack.c.h.b16 %v1622
    %v1815 = vpack.c.b16 %v1689, %v1687
    %v1816 = vpack.c.b16 %v1690, %v1688
    %v1817 = vpack.c.b16 %v1693, %v1691
    %v1818 = vpack.c.b16 %v1694, %v1692
    %v1819 = vpack.c.b16 %v1697, %v1695
    %v1820 = vpack.c.b16 %v1698, %v1696
    %v1821 = vpack.c.b16 %v1701, %v1699
    %v1822 = vpack.c.b16 %v1702, %v1700
    %v1823 = vpack.c.b16 %v1705, %v1703
    %v1824 = vpack.c.b16 %v1706, %v1704
    %v1825 = vpack.c.b16 %v1709, %v1707
    %v1826 = vpack.c.b16 %v1710, %v1708
    %v1827 = vpack.c.b16 %v1713, %v1711
    %v1828 = vpack.c.b16 %v1714, %v1712
    %v1829 = vpack.c.b16 %v1717, %v1715
    %v1830 = vpack.c.b16 %v1718, %v1716
    %v1831 = vpack.c.b16 %v1721, %v1719
    %v1832 = vpack.c.b16 %v1722, %v1720
    %v1833 = vpack.c.b16 %v1725, %v1723
    %v1834 = vpack.c.b16 %v1726, %v1724
    %v1835 = vpack.c.b16 %v1729, %v1727
    %v1836 = vpack.c.b16 %v1730, %v1728
    %v1837 = vpack.c.b16 %v1733, %v1731
    %v1838 = vpack.c.b16 %v1734, %v1732
    %v1839 = vpack.c.b16 %v1737, %v1735
    %v1840 = vpack.c.b16 %v1738, %v1736
    %v1841 = vpack.c.b16 %v1741, %v1739
    %v1842 = vpack.c.b16 %v1742, %v1740
    %v1843 = vpack.c.b16 %v1745, %v1743
    %v1844 = vpack.c.b16 %v1746, %v1744
    %v1845 = vpack.c.b16 %v1749, %v1747
    %v1846 = vpack.c.b16 %v1750, %v1748
    %v1847 = vpack.c.b16 %v1753, %v1751
    %v1848 = vpack.c.b16 %v1754, %v1752
    %v1849 = vpack.c.b16 %v1757, %v1755
    %v1850 = vpack.c.b16 %v1758, %v1756
    %v1851 = vpack.c.b16 %v1761, %v1759
    %v1852 = vpack.c.b16 %v1762, %v1760
    %v1853 = vpack.c.b16 %v1765, %v1763
    %v1854 = vpack.c.b16 %v1766, %v1764
    %v1855 = vpack.c.b16 %v1769, %v1767
    %v1856 = vpack.c.b16 %v1770, %v1768
    %v1857 = vpack.c.b16 %v1773, %v1771
    %v1858 = vpack.c.b16 %v1774, %v1772
    %v1859 = vpack.c.b16 %v1777, %v1775
    %v1860 = vpack.c.b16 %v1778, %v1776
    %v1861 = vpack.c.b16 %v1781, %v1779
    %v1862 = vpack.c.b16 %v1782, %v1780
    %v1863 = vpack.c.b16 %v1785, %v1783
    %v1864 = vpack.c.b16 %v1786, %v1784
    %v1865 = vpack.c.b16 %v1789, %v1787
    %v1866 = vpack.c.b16 %v1790, %v1788
    %v1867 = vpack.c.b16 %v1793, %v1791
    %v1868 = vpack.c.b16 %v1794, %v1792
    %v1869 = vpack.c.b16 %v1797, %v1795
    %v1870 = vpack.c.b16 %v1798, %v1796
    %v1871 = vpack.c.b16 %v1801, %v1799
    %v1872 = vpack.c.b16 %v1802, %v1800
    %v1873 = vpack.c.b16 %v1805, %v1803
    %v1874 = vpack.c.b16 %v1806, %v1804
    %v1875 = vpack.c.b16 %v1809, %v1807
    %v1876 = vpack.c.b16 %v1810, %v1808
    %v1877 = vpack.c.b16 %v1813, %v1811
    %v1878 = vpack.c.b16 %v1814, %v1812
    %1943 = vmatpush.bf16.msra.mxu0 %v1829
    %1944 = vmatpush.bf16.msra.mxu0 %v1827
    %1945 = vmatpush.bf16.msra.mxu0 %v1825
    %1946 = vmatpush.bf16.msra.mxu0 %v1823
    %1947 = vmatpush.bf16.msra.mxu0 %v1821
    %1948 = vmatpush.bf16.msra.mxu0 %v1819
    %1949 = vmatpush.bf16.msra.mxu0 %v1817
    %1950 = vmatpush.bf16.msra.mxu0 %v1815
    %1951 = vmatmul.bf16.gmra.mxu0 %v1555
    %v1952 = vpop.f32.mrf.mxu0
    %v1953 = vadd.f32 0.0, %v1952
    %v1954 = vpop.f32.mrf.mxu0
    %1955 = vdwg.mxu0
    %1956 = vmatpush.bf16.msra.mxu0 %v1845
    %1957 = vmatpush.bf16.msra.mxu0 %v1843
    %1958 = vmatpush.bf16.msra.mxu0 %v1841
    %1959 = vmatpush.bf16.msra.mxu0 %v1839
    %1960 = vmatpush.bf16.msra.mxu0 %v1837
    %1961 = vmatpush.bf16.msra.mxu0 %v1835
    %1962 = vmatpush.bf16.msra.mxu0 %v1833
    %1963 = vmatpush.bf16.msra.mxu0 %v1831
    %1964 = vmatmul.bf16.gmra.mxu0 %v1556
    %v1965 = vpop.f32.mrf.mxu0
    %v1966 = vadd.f32 %v1953, %v1965
    %v1967 = vpop.f32.mrf.mxu0
    %1968 = vdwg.mxu0
    %1969 = vmatpush.bf16.msra.mxu0 %v1861
    %1970 = vmatpush.bf16.msra.mxu0 %v1859
    %1971 = vmatpush.bf16.msra.mxu0 %v1857
    %1972 = vmatpush.bf16.msra.mxu0 %v1855
    %1973 = vmatpush.bf16.msra.mxu0 %v1853
    %1974 = vmatpush.bf16.msra.mxu0 %v1851
    %1975 = vmatpush.bf16.msra.mxu0 %v1849
    %1976 = vmatpush.bf16.msra.mxu0 %v1847
    %1977 = vmatmul.bf16.gmra.mxu0 %v1557
    %v1978 = vpop.f32.mrf.mxu0
    %v1979 = vadd.f32 %v1966, %v1978
    %v1980 = vpop.f32.mrf.mxu0
    %1981 = vdwg.mxu0
    %1982 = vmatpush.bf16.msra.mxu0 %v1877
    %1983 = vmatpush.bf16.msra.mxu0 %v1875
    %1984 = vmatpush.bf16.msra.mxu0 %v1873
    %1985 = vmatpush.bf16.msra.mxu0 %v1871
    %1986 = vmatpush.bf16.msra.mxu0 %v1869
    %1987 = vmatpush.bf16.msra.mxu0 %v1867
    %1988 = vmatpush.bf16.msra.mxu0 %v1865
    %1989 = vmatpush.bf16.msra.mxu0 %v1863
    %1990 = vmatmul.bf16.gmra.mxu0 %v1558
    %v1991 = vpop.f32.mrf.mxu0
    %v1992 = vadd.f32 %v1979, %v1991
    %v1993 = vpop.f32.mrf.mxu0
    %1994 = vdwg.mxu0
    %1995 = vmatpush.bf16.msra.mxu0 %v1830
    %1996 = vmatpush.bf16.msra.mxu0 %v1828
    %1997 = vmatpush.bf16.msra.mxu0 %v1826
    %1998 = vmatpush.bf16.msra.mxu0 %v1824
    %1999 = vmatpush.bf16.msra.mxu0 %v1822
    %2000 = vmatpush.bf16.msra.mxu0 %v1820
    %2001 = vmatpush.bf16.msra.mxu0 %v1818
    %2002 = vmatpush.bf16.msra.mxu0 %v1816
    %2003 = vmatmul.bf16.gmra.mxu0 %v1555
    %v2004 = vpop.f32.mrf.mxu0
    %v2005 = vadd.f32 0.0, %v2004
    %v2006 = vpop.f32.mrf.mxu0
    %2007 = vdwg.mxu0
    %2008 = vmatpush.bf16.msra.mxu0 %v1846
    %2009 = vmatpush.bf16.msra.mxu0 %v1844
    %2010 = vmatpush.bf16.msra.mxu0 %v1842
    %2011 = vmatpush.bf16.msra.mxu0 %v1840
    %2012 = vmatpush.bf16.msra.mxu0 %v1838
    %2013 = vmatpush.bf16.msra.mxu0 %v1836
    %2014 = vmatpush.bf16.msra.mxu0 %v1834
    %2015 = vmatpush.bf16.msra.mxu0 %v1832
    %2016 = vmatmul.bf16.gmra.mxu0 %v1556
    %v2017 = vpop.f32.mrf.mxu0
    %v2018 = vadd.f32 %v2005, %v2017
    %v2019 = vpop.f32.mrf.mxu0
    %2020 = vdwg.mxu0
    %2021 = vmatpush.bf16.msra.mxu0 %v1862
    %2022 = vmatpush.bf16.msra.mxu0 %v1860
    %2023 = vmatpush.bf16.msra.mxu0 %v1858
    %2024 = vmatpush.bf16.msra.mxu0 %v1856
    %2025 = vmatpush.bf16.msra.mxu0 %v1854
    %2026 = vmatpush.bf16.msra.mxu0 %v1852
    %2027 = vmatpush.bf16.msra.mxu0 %v1850
    %2028 = vmatpush.bf16.msra.mxu0 %v1848
    %2029 = vmatmul.bf16.gmra.mxu0 %v1557
    %v2030 = vpop.f32.mrf.mxu0
    %v2031 = vadd.f32 %v2018, %v2030
    %v2032 = vpop.f32.mrf.mxu0
    %2033 = vdwg.mxu0
    %2034 = vmatpush.bf16.msra.mxu0 %v1878
    %2035 = vmatpush.bf16.msra.mxu0 %v1876
    %2036 = vmatpush.bf16.msra.mxu0 %v1874
    %2037 = vmatpush.bf16.msra.mxu0 %v1872
    %2038 = vmatpush.bf16.msra.mxu0 %v1870
    %2039 = vmatpush.bf16.msra.mxu0 %v1868
    %2040 = vmatpush.bf16.msra.mxu0 %v1866
    %2041 = vmatpush.bf16.msra.mxu0 %v1864
    %2042 = vmatmul.bf16.gmra.mxu0 %v1558
    %v2043 = vpop.f32.mrf.mxu0
    %v2044 = vadd.f32 %v2031, %v2043
    %v2045 = vpop.f32.mrf.mxu0
    %2046 = vdwg.mxu0
    %vm2047 = vcmask 1041408
    %v2048 = vsel %vm2047, %v1992, 0.0
    %v2049 = vrot.slane %v2048, 4
    %v2050 = vadd.f32 %v2048, %v2049
    %v2051 = vrot.slane %v2050, 2
    %v2052 = vadd.f32 %v2050, %v2051
    %v2053 = vrot.slane %v2052, 1
    %v2054 = vadd.f32 %v2052, %v2053
    %v2055 = vsel %vm2047, %v2044, 0.0
    %v2056 = vrot.slane %v2055, 4
    %v2057 = vadd.f32 %v2055, %v2056
    %v2058 = vrot.slane %v2057, 2
    %v2059 = vadd.f32 %v2057, %v2058
    %v2060 = vrot.slane %v2059, 1
    %v2061 = vadd.f32 %v2059, %v2060
    %v2062 = vmul.f32 %v2054, 0.5
    %v2063 = vmul.f32 %v2061, 0.5
    %v2064 = vmul.f32 %v1992, %v1992
    %v2065 = vmul.f32 %v2044, %v2044
    %v2066 = vsel %vm2047, %v2064, 0.0
    %v2067 = vrot.slane %v2066, 4
    %v2068 = vadd.f32 %v2066, %v2067
    %v2069 = vrot.slane %v2068, 2
    %v2070 = vadd.f32 %v2068, %v2069
    %v2071 = vrot.slane %v2070, 1
    %v2072 = vadd.f32 %v2070, %v2071
    %v2073 = vsel %vm2047, %v2065, 0.0
    %v2074 = vrot.slane %v2073, 4
    %v2075 = vadd.f32 %v2073, %v2074
    %v2076 = vrot.slane %v2075, 2
    %v2077 = vadd.f32 %v2075, %v2076
    %v2078 = vrot.slane %v2077, 1
    %v2079 = vadd.f32 %v2077, %v2078
    %v2080 = vmul.f32 %v2072, 0.5
    %v2081 = vmul.f32 %v2079, 0.5
    %v2082 = vld [vmem:[%s4] sm:$0xff]
    %v2083 = vld [vmem:[%s4 + $0x8] sm:$0xff]
    %v2084 = vld [vmem:[%s4 + $0x10] sm:$0xff]
    %v2085 = vld [vmem:[%s4 + $0x18] sm:$0xff]
    %v2086 = vld [vmem:[%s3] sm:$0xff]
    %v2087 = vld [vmem:[%s3 + $0x8] sm:$0xff]
    %v2088 = vld [vmem:[%s3 + $0x10] sm:$0xff]
    %v2089 = vld [vmem:[%s3 + $0x18] sm:$0xff]
    %v2090 = vld [vmem:[%s3 + $0x20] sm:$0xff]
    %v2091 = vld [vmem:[%s3 + $0x28] sm:$0xff]
    %v2092 = vld [vmem:[%s3 + $0x30] sm:$0xff]
    %v2093 = vld [vmem:[%s3 + $0x38] sm:$0xff]
    %v2094 = vld [vmem:[%s3 + $0x40] sm:$0xff]
    %v2095 = vld [vmem:[%s3 + $0x48] sm:$0xff]
    %v2096 = vld [vmem:[%s3 + $0x50] sm:$0xff]
    %v2097 = vld [vmem:[%s3 + $0x58] sm:$0xff]
    %v2098 = vld [vmem:[%s3 + $0x60] sm:$0xff]
    %v2099 = vld [vmem:[%s3 + $0x68] sm:$0xff]
    %v2100 = vld [vmem:[%s3 + $0x70] sm:$0xff]
    %v2101 = vld [vmem:[%s3 + $0x78] sm:$0xff]
    %v2102 = vld [vmem:[%s3 + $0x80] sm:$0xff]
    %v2103 = vld [vmem:[%s3 + $0x88] sm:$0xff]
    %v2104 = vld [vmem:[%s3 + $0x90] sm:$0xff]
    %v2105 = vld [vmem:[%s3 + $0x98] sm:$0xff]
    %v2106 = vld [vmem:[%s3 + $0xa0] sm:$0xff]
    %v2107 = vld [vmem:[%s3 + $0xa8] sm:$0xff]
    %v2108 = vld [vmem:[%s3 + $0xb0] sm:$0xff]
    %v2109 = vld [vmem:[%s3 + $0xb8] sm:$0xff]
    %v2110 = vld [vmem:[%s3 + $0xc0] sm:$0xff]
    %v2111 = vld [vmem:[%s3 + $0xc8] sm:$0xff]
    %v2112 = vld [vmem:[%s3 + $0xd0] sm:$0xff]
    %v2113 = vld [vmem:[%s3 + $0xd8] sm:$0xff]
    %v2114 = vld [vmem:[%s3 + $0xe0] sm:$0xff]
    %v2115 = vld [vmem:[%s3 + $0xe8] sm:$0xff]
    %v2116 = vld [vmem:[%s3 + $0xf0] sm:$0xff]
    %v2117 = vld [vmem:[%s3 + $0xf8] sm:$0xff]
    %2118 = vmatpush.msra.mxu0 %v2101
    %2119 = vmatpush.msra.mxu0 %v2100
    %2120 = vmatpush.msra.mxu0 %v2099
    %2121 = vmatpush.msra.mxu0 %v2098
    %2122 = vmatpush.msra.mxu0 %v2097
    %2123 = vmatpush.msra.mxu0 %v2096
    %2124 = vmatpush.msra.mxu0 %v2095
    %2125 = vmatpush.msra.mxu0 %v2094
    %2126 = vmatpush.msra.mxu0 %v2093
    %2127 = vmatpush.msra.mxu0 %v2092
    %2128 = vmatpush.msra.mxu0 %v2091
    %2129 = vmatpush.msra.mxu0 %v2090
    %2130 = vmatpush.msra.mxu0 %v2089
    %2131 = vmatpush.msra.mxu0 %v2088
    %2132 = vmatpush.msra.mxu0 %v2087
    %2133 = vmatpush.msra.mxu0 %v2086
    %2134 = vmatmul.f32.gmra.mxu0 %v2062
    %v2135 = vpop.f32.mrf.mxu0
    %v2136 = vadd.f32 0.0, %v2135
    %2137 = vdwg.mxu0
    %2138 = vmatpush.msra.mxu0 %v2117
    %2139 = vmatpush.msra.mxu0 %v2116
    %2140 = vmatpush.msra.mxu0 %v2115
    %2141 = vmatpush.msra.mxu0 %v2114
    %2142 = vmatpush.msra.mxu0 %v2113
    %2143 = vmatpush.msra.mxu0 %v2112
    %2144 = vmatpush.msra.mxu0 %v2111
    %2145 = vmatpush.msra.mxu0 %v2110
    %2146 = vmatpush.msra.mxu0 %v2109
    %2147 = vmatpush.msra.mxu0 %v2108
    %2148 = vmatpush.msra.mxu0 %v2107
    %2149 = vmatpush.msra.mxu0 %v2106
    %2150 = vmatpush.msra.mxu0 %v2105
    %2151 = vmatpush.msra.mxu0 %v2104
    %2152 = vmatpush.msra.mxu0 %v2103
    %2153 = vmatpush.msra.mxu0 %v2102
    %2154 = vmatmul.f32.gmra.mxu0 %v2063
    %v2155 = vpop.f32.mrf.mxu0
    %v2156 = vadd.f32 %v2136, %v2155
    %2157 = vdwg.mxu0
    %vm2158 = vcmask 130048
    %v2160 = vsel %vm2158, %v2156, 0
    %2162 = vmatpush.msra.mxu0 0.0
    %2163 = vmatpush.msra.mxu0 0.0
    %2164 = vmatpush.msra.mxu0 0.0
    %2165 = vmatpush.msra.mxu0 0.0
    %2166 = vmatpush.msra.mxu0 0.0
    %2167 = vmatpush.msra.mxu0 0.0
    %2168 = vmatpush.msra.mxu0 0.0
    %2169 = vmatpush.msra.mxu0 0.0
    %2170 = vmatpush.msra.mxu0 0.0
    %2171 = vmatpush.msra.mxu0 0.0
    %2172 = vmatpush.msra.mxu0 0.0
    %2173 = vmatpush.msra.mxu0 0.0
    %2174 = vmatpush.msra.mxu0 0.0
    %2175 = vmatpush.msra.mxu0 0.0
    %2176 = vmatpush.msra.mxu0 %v2084
    %2177 = vmatpush.msra.mxu0 %v2082
    %2178 = vmatmul.f32.gmra.mxu0 %v2160
    %v2179 = vpop.f32.mrf.mxu0
    %v2180 = vadd.f32 0.0, %v2179
    %2181 = vdwg.mxu0
    %2182 = vmatpush.msra.mxu0 0.0
    %2183 = vmatpush.msra.mxu0 0.0
    %2184 = vmatpush.msra.mxu0 0.0
    %2185 = vmatpush.msra.mxu0 0.0
    %2186 = vmatpush.msra.mxu0 0.0
    %2187 = vmatpush.msra.mxu0 0.0
    %2188 = vmatpush.msra.mxu0 0.0
    %2189 = vmatpush.msra.mxu0 0.0
    %2190 = vmatpush.msra.mxu0 0.0
    %2191 = vmatpush.msra.mxu0 0.0
    %2192 = vmatpush.msra.mxu0 0.0
    %2193 = vmatpush.msra.mxu0 0.0
    %2194 = vmatpush.msra.mxu0 0.0
    %2195 = vmatpush.msra.mxu0 0.0
    %2196 = vmatpush.msra.mxu0 %v2085
    %2197 = vmatpush.msra.mxu0 %v2083
    %2198 = vmatmul.f32.gmra.mxu0 %v2160
    %v2199 = vpop.f32.mrf.mxu0
    %v2200 = vadd.f32 0.0, %v2199
    %2201 = vdwg.mxu0
    %2202 = vmatpush.msra.mxu0 %v2101
    %2203 = vmatpush.msra.mxu0 %v2100
    %2204 = vmatpush.msra.mxu0 %v2099
    %2205 = vmatpush.msra.mxu0 %v2098
    %2206 = vmatpush.msra.mxu0 %v2097
    %2207 = vmatpush.msra.mxu0 %v2096
    %2208 = vmatpush.msra.mxu0 %v2095
    %2209 = vmatpush.msra.mxu0 %v2094
    %2210 = vmatpush.msra.mxu0 %v2093
    %2211 = vmatpush.msra.mxu0 %v2092
    %2212 = vmatpush.msra.mxu0 %v2091
    %2213 = vmatpush.msra.mxu0 %v2090
    %2214 = vmatpush.msra.mxu0 %v2089
    %2215 = vmatpush.msra.mxu0 %v2088
    %2216 = vmatpush.msra.mxu0 %v2087
    %2217 = vmatpush.msra.mxu0 %v2086
    %2218 = vmatmul.f32.gmra.mxu0 %v2080
    %v2219 = vpop.f32.mrf.mxu0
    %v2220 = vadd.f32 0.0, %v2219
    %2221 = vdwg.mxu0
    %2222 = vmatpush.msra.mxu0 %v2117
    %2223 = vmatpush.msra.mxu0 %v2116
    %2224 = vmatpush.msra.mxu0 %v2115
    %2225 = vmatpush.msra.mxu0 %v2114
    %2226 = vmatpush.msra.mxu0 %v2113
    %2227 = vmatpush.msra.mxu0 %v2112
    %2228 = vmatpush.msra.mxu0 %v2111
    %2229 = vmatpush.msra.mxu0 %v2110
    %2230 = vmatpush.msra.mxu0 %v2109
    %2231 = vmatpush.msra.mxu0 %v2108
    %2232 = vmatpush.msra.mxu0 %v2107
    %2233 = vmatpush.msra.mxu0 %v2106
    %2234 = vmatpush.msra.mxu0 %v2105
    %2235 = vmatpush.msra.mxu0 %v2104
    %2236 = vmatpush.msra.mxu0 %v2103
    %2237 = vmatpush.msra.mxu0 %v2102
    %2238 = vmatmul.f32.gmra.mxu0 %v2081
    %v2239 = vpop.f32.mrf.mxu0
    %v2240 = vadd.f32 %v2220, %v2239
    %2241 = vdwg.mxu0
    %v2243 = vsel %vm2158, %v2240, 0
    %2245 = vmatpush.msra.mxu0 0.0
    %2246 = vmatpush.msra.mxu0 0.0
    %2247 = vmatpush.msra.mxu0 0.0
    %2248 = vmatpush.msra.mxu0 0.0
    %2249 = vmatpush.msra.mxu0 0.0
    %2250 = vmatpush.msra.mxu0 0.0
    %2251 = vmatpush.msra.mxu0 0.0
    %2252 = vmatpush.msra.mxu0 0.0
    %2253 = vmatpush.msra.mxu0 0.0
    %2254 = vmatpush.msra.mxu0 0.0
    %2255 = vmatpush.msra.mxu0 0.0
    %2256 = vmatpush.msra.mxu0 0.0
    %2257 = vmatpush.msra.mxu0 0.0
    %2258 = vmatpush.msra.mxu0 0.0
    %2259 = vmatpush.msra.mxu0 %v2084
    %2260 = vmatpush.msra.mxu0 %v2082
    %2261 = vmatmul.f32.gmra.mxu0 %v2243
    %v2262 = vpop.f32.mrf.mxu0
    %v2263 = vadd.f32 0.0, %v2262
    %2264 = vdwg.mxu0
    %2265 = vmatpush.msra.mxu0 0.0
    %2266 = vmatpush.msra.mxu0 0.0
    %2267 = vmatpush.msra.mxu0 0.0
    %2268 = vmatpush.msra.mxu0 0.0
    %2269 = vmatpush.msra.mxu0 0.0
    %2270 = vmatpush.msra.mxu0 0.0
    %2271 = vmatpush.msra.mxu0 0.0
    %2272 = vmatpush.msra.mxu0 0.0
    %2273 = vmatpush.msra.mxu0 0.0
    %2274 = vmatpush.msra.mxu0 0.0
    %2275 = vmatpush.msra.mxu0 0.0
    %2276 = vmatpush.msra.mxu0 0.0
    %2277 = vmatpush.msra.mxu0 0.0
    %2278 = vmatpush.msra.mxu0 0.0
    %2279 = vmatpush.msra.mxu0 %v2085
    %2280 = vmatpush.msra.mxu0 %v2083
    %2281 = vmatmul.f32.gmra.mxu0 %v2243
    %v2282 = vpop.f32.mrf.mxu0
    %v2283 = vadd.f32 0.0, %v2282
    %2284 = vdwg.mxu0
    %v2285 = vmul.f32 %v2180, %v2180
    %v2286 = vmul.f32 %v2200, %v2200
    %v2287 = vsub.f32 %v2263, %v2285
    %v2288 = vsub.f32 %v2283, %v2286
    %s2289 = scalar_lea.vmem %s4, 32
    %v2290 = vld [vmem:[%s2289] ss:$8 sm:$0x3]
    %s2291 = scalar_lea.vmem %s4, 33
    %v2292 = vld [vmem:[%s2291] ss:$8 sm:$0x3]
    %v2293 = vperm.slane %v2180, 0
    %v2294 = vperm.slane %v2200, 0
    %v2295 = vsub.f32 %v1992, %v2293
    %v2296 = vsub.f32 %v2044, %v2294
    %v2297 = vadd.f32 %v2287, 1e-05
    %v2298 = vadd.f32 %v2288, 1e-05
    %v2299 = vrsqrt.pop %v2297
    %v2300 = vmul.f32 %v2299, %v2297
    %v2301 = vmul.f32 %v2300, %v2299
    %v2302 = vmul.f32 0.5, %v2301
    %v2303 = vsub.f32 1.5, %v2302
    %v2304 = vmul.f32 %v2299, %v2303
    %vm2305 = vweird.f32 %v2297
    %vm2306 = vweird.f32 %v2299
    %vm2307 = vmor %vm2305, %vm2306
    %v2308 = vsel %vm2307, %v2299, %v2304
    %v2309 = vrsqrt.pop %v2298
    %v2310 = vmul.f32 %v2309, %v2298
    %v2311 = vmul.f32 %v2310, %v2309
    %v2312 = vmul.f32 0.5, %v2311
    %v2313 = vsub.f32 1.5, %v2312
    %v2314 = vmul.f32 %v2309, %v2313
    %vm2315 = vweird.f32 %v2298
    %vm2316 = vweird.f32 %v2309
    %vm2317 = vmor %vm2315, %vm2316
    %v2318 = vsel %vm2317, %v2309, %v2314
    %v2319 = vperm.slane %v2308, 0
    %v2320 = vperm.slane %v2318, 0
    %v2321 = vmul.f32 %v2295, %v2319
    %v2322 = vmul.f32 %v2296, %v2320
    %v2324 = vperm.slane %v2290, 0
    %v2325 = vperm.slane %v2290, 1
    %v2328 = vmul.f32 %v2321, %v2324
    %v2329 = vmul.f32 %v2322, %v2325
    %v2331 = vperm.slane %v2292, 0
    %v2332 = vperm.slane %v2292, 1
    %v2335 = vadd.f32 %v2328, %v2331
    %v2336 = vadd.f32 %v2329, %v2332
    %vm2337 = vcmp.gt.f32.partialorder %v2335, 0.0
    %vm2338 = vcmp.gt.f32.partialorder %v2336, 0.0
    %v2339 = vmul.f32 %v2335, 0.2
    %v2340 = vmul.f32 %v2336, 0.2
    %v2341 = vsel %vm2337, %v2335, %v2339
    %v2342 = vsel %vm2338, %v2336, %v2340
    %v2345 = vrot.slane %v2342, 6
    %v2346 = vsel %vm2047, %v2341, %v2345
    %2348 = vst [vmem:[%s5] sm:$0xf] %v2346
    %s2349 = scalar_lea.vmem %s4, 34
    %v2350 = vld [vmem:[%s2349] ss:$8 sm:$0x3]
    %v2352 = vperm.slane %v2350, 0
    %v2353 = vperm.slane %v2350, 1
    %v2356 = vmul.f32 %v2341, %v2352
    %v2357 = vmul.f32 %v2342, %v2353
    %v2358 = vsel %vm2047, %v2356, 0.0
    %v2359 = vsel %vm2047, %v2357, 0.0
    %v2360 = vadd.f32 %v2358, %v2359
    %2361 = vadd.xlane.f32.xlu0 %v2360
    %v2362 = vpop.xlane.xlu0 %2361
    %v2363 = vxor.u32 %v2362, 2147483648
    %v2364 = vmul.f32 %v2363, 1.442695
    %v2365 = vpow.pop %v2364
    %v2366 = vadd.f32 %v2365, 1.0
    %v2367 = vrcp.pop %v2366
    %v2368 = vmul.f32 %v2366, %v2367
    %v2369 = vsub.f32 1.0, %v2368
    %v2370 = vmul.f32 %v2367, %v2369
    %v2371 = vadd.f32 %v2367, %v2370
    %vm2372 = vweird.f32 %v2366
    %vm2373 = vweird.f32 %v2367
    %vm2374 = vmor %vm2372, %vm2373
    %v2375 = vsel %vm2374, %v2367, %v2371
    %v2376 = vand.u32 2147483647, %v2366
    %vm2377 = vcmp.eq.f32.partialorder %v2376, 8.507059e+37
    %v2378 = vand.u32 %v2366, 2147483648
    %v2379 = vor.u32 1.1754944e-38, %v2378
    %v2380 = vsel %vm2377, %v2379, %v2375
    %v2381 = vmul.f32 1.0, %v2380
    %vm2382 = vcmask 1024
    %2383 = vst.msk [vmem:[%s6] sm:$0x3] %vm2382, %v2381
    // Predicated region
    $region30: #{forward.1} parent=1 // pred_check
      _
    $region31: #{forward.1} parent=1 // pred_check_branch
      %2385 = sbr.rel (0) target = $region33
    $region32: #{forward.1} parent=1 // pred_region
      _
    $region33: #{forward.1} parent=1 // pred_fallthru
      _
    // Predicated region
    $region34: #{forward.1} parent=1 // pred_check
      _
    $region35: #{forward.1} parent=1 // pred_check_branch
      %2387 = sbr.rel (0) target = $region37
    $region36: #{forward.1} parent=1 // pred_region
      _
    $region37: #{forward.1} parent=1 // pred_fallthru
      _
    // Predicated region
    $region38: #{forward.1} parent=1 // pred_check
      _
    $region39: #{forward.1} parent=1 // pred_check_branch
      %2389 = sbr.rel (0) target = $region41
    $region40: #{forward.1} parent=1 // pred_region
      _
    $region41: #{forward.1} parent=1 // pred_fallthru
      _
    // Predicated region
    $region42: #{forward.1} parent=1 // pred_check
      _
    $region43: #{forward.1} parent=1 // pred_check_branch
      %2391 = sbr.rel (0) target = $region45
    $region44: #{forward.1} parent=1 // pred_region
      _
    $region45: #{forward.1} parent=1 // pred_fallthru
      _
    %2392 = vsyncpa [#allocation3], 1
    %2393 = vsyncpa [#allocation5], 1

</llo_original>
